<compile_context>
chip_gen: v5e
topology: v5e:2x2
jax: 0.10.0
libtpu: 0.0.40
codegen_flags: <defaults>
</compile_context>

<pallas_src>
import jax
import jax.numpy as jnp
from jax.experimental import pallas as pl
from jax.experimental.pallas import tpu as pltpu


# ----------------------------- Pallas kernel --------------------------------
def _edgeconv_kernel(x_ref, w1_ref, w2_ref, w3_ref,
                     c2_ref, c3_ref, s2_ref, b2_ref, o_ref):
    kb = pl.program_id(2)

    def lrelu(h):
        return jnp.maximum(h, 0.2 * h)            # LeakyReLU(0.2)

    def neighbour(x):                             # x: [Cin, TN] bf16
        # conv1 -> LeakyReLU          (norm1 after conv1 is folded into w2/c2)
        a1 = lrelu(jnp.dot(w1_ref[...], x, preferred_element_type=jnp.float32))
        # conv2 -> LeakyReLU          (norm1 after conv2 is folded into w3/c3)
        a2 = lrelu(jnp.dot(w2_ref[...], a1.astype(w2_ref.dtype),
                           preferred_element_type=jnp.float32) + c2_ref[...])
        # conv3 -> LeakyReLU -> norm2 (kept explicit: scale may be negative)
        h3 = jnp.dot(w3_ref[...], a2.astype(w3_ref.dtype),
                     preferred_element_type=jnp.float32) + c3_ref[...]
        return lrelu(h3) * s2_ref[...] + b2_ref[...]   # [Cout, TN] f32

    n_kb = x_ref.shape[1]                         # static: neighbours per step
    y = neighbour(x_ref[0, 0])
    for j in range(1, n_kb):                      # static unroll, in-register max
        y = jnp.maximum(y, neighbour(x_ref[0, j]))

    # Running max across the (arbitrary) K//KB grid axis; the output block is
    # resident and written back to HBM once per (b, n)-tile.
    @pl.when(kb == 0)
    def _():
        o_ref[0] = y

    @pl.when(kb > 0)
    def _():
        o_ref[0] = jnp.maximum(o_ref[0], y)


# ------------------------------- wrapper -------------------------------------
def _pick_tile_n(n, cap=256):
    """Largest lane-legal point tile <= cap that evenly divides n."""
    if n <= cap:
        return n
    for tn in range(cap - cap % 128, 0, -128):     # multiples of 128 lanes only
        if tn and n % tn == 0:
            return tn
    return n                                       # fall back to full extent


def _pick_kb(k, cap=8):
    """Largest neighbour block <= cap that evenly divides k."""
    for kb in range(min(k, cap), 0, -1):
        if k % kb == 0:
            return kb
    return 1


def edgeconv_pallas(feat, w1, w2, w3, s1, b1, s2, b2, *,
                    tile_n_cap=256, kb_cap=8):
    """EdgeConv forward.

    feat:      [B, K, Cin, N] graph features (channels-first, lane-dense N).
    w1/w2/w3:  conv weights stored as [Cin_layer, Cout_layer].
    s1,b1 / s2,b2: folded eval-mode BatchNorm scale/shift vectors ([Chid]/[Cout]).
    Returns [B, Cout, N] float32.
    """
    B, K, Cin, N = feat.shape
    Cout = w3.shape[1]

    # Fold norm1 (applied after conv1 and after conv2) into the following conv
    # at trace time, and move everything into the transposed orientation
    # (channels on sublanes, points on lanes).  Folding is done in f32, then
    # the matmul operands are cast to bf16 for the MXU.
    w1t = jnp.transpose(w1).astype(jnp.bfloat16)                     # [Chid, Cin]
    w2t = (jnp.transpose(w2) * s1[None, :]).astype(jnp.bfloat16)     # [Chid, Chid]
    w3t = (jnp.transpose(w3) * s1[None, :]).astype(jnp.bfloat16)     # [Cout, Chid]
    c2 = (jnp.transpose(w2) @ b1)[:, None].astype(jnp.float32)       # [Chid, 1]
    c3 = (jnp.transpose(w3) @ b1)[:, None].astype(jnp.float32)       # [Cout, 1]
    s2c = s2[:, None].astype(jnp.float32)                            # [Cout, 1]
    b2c = b2[:, None].astype(jnp.float32)                            # [Cout, 1]

    x = feat.astype(jnp.bfloat16)

    tn = _pick_tile_n(N, tile_n_cap)
    kb = _pick_kb(K, kb_cap)
    grid = (B, N // tn, K // kb)

    return pl.pallas_call(
        _edgeconv_kernel,
        out_shape=jax.ShapeDtypeStruct((B, Cout, N), jnp.float32),
        grid_spec=pltpu.PrefetchScalarGridSpec(
            num_scalar_prefetch=0,
            grid=grid,
            in_specs=[
                pl.BlockSpec((1, kb, Cin, tn), lambda b, n, k: (b, k, 0, n)),
                pl.BlockSpec(w1t.shape, lambda b, n, k: (0, 0)),
                pl.BlockSpec(w2t.shape, lambda b, n, k: (0, 0)),
                pl.BlockSpec(w3t.shape, lambda b, n, k: (0, 0)),
                pl.BlockSpec(c2.shape, lambda b, n, k: (0, 0)),
                pl.BlockSpec(c3.shape, lambda b, n, k: (0, 0)),
                pl.BlockSpec(s2c.shape, lambda b, n, k: (0, 0)),
                pl.BlockSpec(b2c.shape, lambda b, n, k: (0, 0)),
            ],
            out_specs=pl.BlockSpec((1, Cout, tn), lambda b, n, k: (b, 0, n)),
        ),
        compiler_params=pltpu.CompilerParams(
            dimension_semantics=("parallel", "parallel", "arbitrary"),
            vmem_limit_bytes=32 * 1024 * 1024,
        ),
    )(x, w1t, w2t, w3t, c2, c3, s2c, b2c)


# ------------------------------ JAX glue -------------------------------------
def get_graph_feature(x, k):
    """x: [B, C, N] -> [B, k, 2C, N] graph features (channels-first, lane-dense)."""
    B, C, N = x.shape
    xt = jnp.transpose(x, (0, 2, 1))                               # [B, N, C]
    inner = jnp.einsum('bnc,bmc->bnm', xt, xt)
    sq = jnp.sum(xt * xt, axis=-1)
    neg_dist = 2.0 * inner - sq[:, :, None] - sq[:, None, :]       # -||xi - xj||^2
    idx = jax.lax.top_k(neg_dist, k)[1]                            # [B, N, k]
    batch_idx = jnp.arange(B)[:, None, None]
    neighbors = xt[batch_idx, idx]                                 # [B, N, k, C]
    center = jnp.broadcast_to(xt[:, :, None, :], (B, N, k, C))
    feat = jnp.concatenate([neighbors - center, center], axis=-1)  # [B, N, k, 2C]
    return jnp.transpose(feat, (0, 2, 3, 1))                       # [B, k, 2C, N]


def fold_bn(gamma, beta, mean, var, eps=1e-5):
    scale = gamma / jnp.sqrt(var + eps)
    shift = beta - mean * scale
    return scale, shift


def reference(feat, w1, w2, w3, s1, b1, s2, b2):
    """Plain-JAX f32 reference on the same [B, K, Cin, N] graph features."""
    h = jnp.transpose(feat, (0, 1, 3, 2))          # [B, K, N, Cin]

    def block(h, w, s, b):
        h = h @ w
        h = jnp.where(h > 0, h, 0.2 * h)           # LeakyReLU(0.2)
        return h * s + b                           # eval-mode BatchNorm

    h = block(h, w1, s1, b1)                       # conv1 / relu / norm1
    h = block(h, w2, s1, b1)                       # conv2 / relu / norm1 (module reuses norm1)
    h = block(h, w3, s2, b2)                       # conv3 / relu / norm2
    h = jnp.max(h, axis=1)                         # max over the k neighbours -> [B, N, Cout]
    return jnp.transpose(h, (0, 2, 1))             # [B, Cout, N]


# -------------------------------- main ---------------------------------------
if __name__ == "__main__":
    B, C, N, K = 2, 4, 16, 8          # point cloud: [B, C, N]
    Cin, Chid, Cout = 2 * C, 64, 32   # EdgeConv(in_channel=2C, out_channel=32, k=8)

    key = jax.random.PRNGKey(0)
    (kx, k1, k2, k3, kg1, kb1, km1, kv1,
     kg2, kb2, km2, kv2) = jax.random.split(key, 12)

    x = jax.random.normal(kx, (B, C, N), jnp.float32)

    # conv weights (PyTorch [out, in, 1, 1] -> stored here as [in, out])
    w1 = jax.random.normal(k1, (Cin, Chid), jnp.float32) * 0.2
    w2 = jax.random.normal(k2, (Chid, Chid), jnp.float32) * 0.1
    w3 = jax.random.normal(k3, (Chid, Cout), jnp.float32) * 0.1

    # BatchNorm params (eval-mode), deterministic but non-trivial
    g1 = jax.random.uniform(kg1, (Chid,), jnp.float32, 0.5, 1.5)
    be1 = jax.random.normal(kb1, (Chid,), jnp.float32) * 0.1
    m1 = jax.random.normal(km1, (Chid,), jnp.float32) * 0.1
    v1 = jax.random.uniform(kv1, (Chid,), jnp.float32, 0.5, 1.5)
    g2 = jax.random.uniform(kg2, (Cout,), jnp.float32, 0.5, 1.5)
    be2 = jax.random.normal(kb2, (Cout,), jnp.float32) * 0.1
    m2 = jax.random.normal(km2, (Cout,), jnp.float32) * 0.1
    v2 = jax.random.uniform(kv2, (Cout,), jnp.float32, 0.5, 1.5)

    s1, b1 = fold_bn(g1, be1, m1, v1)
    s2, b2 = fold_bn(g2, be2, m2, v2)

    feat = get_graph_feature(x, K)                       # [B, K, 2C, N]
    out = edgeconv_pallas(feat, w1, w2, w3, s1, b1, s2, b2)
    jax.block_until_ready(out)

    ref = reference(feat, w1, w2, w3, s1, b1, s2, b2)
    assert out.shape == (B, Cout, N), out.shape
    # bf16 matmul operands -> relaxed tolerance vs the pure-f32 reference.
    assert jnp.allclose(out, ref, atol=5e-2, rtol=5e-2), \
        float(jnp.max(jnp.abs(out - ref)))
    print("KERNEL_OK")
</pallas_src>

<mosaic_0001>
module attributes {stable_mosaic.version = 11 : i64} {
  func.func @_edgeconv_kernel(%arg0: i32, %arg1: i32, %arg2: i32, %arg3: memref<1x8x8x16xbf16, #tpu.memory_space<vmem>>, %arg4: memref<64x8xbf16, #tpu.memory_space<vmem>>, %arg5: memref<64x64xbf16, #tpu.memory_space<vmem>>, %arg6: memref<32x64xbf16, #tpu.memory_space<vmem>>, %arg7: memref<64x1xf32, #tpu.memory_space<vmem>>, %arg8: memref<32x1xf32, #tpu.memory_space<vmem>>, %arg9: memref<32x1xf32, #tpu.memory_space<vmem>>, %arg10: memref<32x1xf32, #tpu.memory_space<vmem>>, %arg11: memref<1x32x16xf32, #tpu.memory_space<vmem>>) attributes {dimension_semantics = [#tpu.dimension_semantics<parallel>, #tpu.dimension_semantics<parallel>, #tpu.dimension_semantics<arbitrary>], iteration_bounds = array<i64: 2, 1, 1>, scalar_prefetch = 0 : i64, scratch_operands = 0 : i64, tpu.core_type = #tpu.core_type<tc>, window_params = [{transform_indices = @transform_0, window_bounds = array<i64: 1, 8, 8, 16>}, {pipeline_mode = #tpu.pipeline_mode<synchronous>, transform_indices = @transform_1, window_bounds = array<i64: 64, 8>}, {pipeline_mode = #tpu.pipeline_mode<synchronous>, transform_indices = @transform_2, window_bounds = array<i64: 64, 64>}, {pipeline_mode = #tpu.pipeline_mode<synchronous>, transform_indices = @transform_3, window_bounds = array<i64: 32, 64>}, {pipeline_mode = #tpu.pipeline_mode<synchronous>, transform_indices = @transform_4, window_bounds = array<i64: 64, 1>}, {pipeline_mode = #tpu.pipeline_mode<synchronous>, transform_indices = @transform_5, window_bounds = array<i64: 32, 1>}, {pipeline_mode = #tpu.pipeline_mode<synchronous>, transform_indices = @transform_6, window_bounds = array<i64: 32, 1>}, {pipeline_mode = #tpu.pipeline_mode<synchronous>, transform_indices = @transform_7, window_bounds = array<i64: 32, 1>}, {transform_indices = @transform_8, window_bounds = array<i64: 1, 32, 16>}]} {
    %c0 = arith.constant 0 : index
    %c0_0 = arith.constant 0 : index
    %c0_1 = arith.constant 0 : index
    %c0_2 = arith.constant 0 : index
    %0 = vector.load %arg3[%c0, %c0_0, %c0_1, %c0_2] : memref<1x8x8x16xbf16, #tpu.memory_space<vmem>>, vector<1x1x8x16xbf16>
    %1 = vector.shape_cast %0 : vector<1x1x8x16xbf16> to vector<8x16xbf16>
    %c0_3 = arith.constant 0 : index
    %c0_4 = arith.constant 0 : index
    %2 = vector.load %arg4[%c0_3, %c0_4] : memref<64x8xbf16, #tpu.memory_space<vmem>>, vector<64x8xbf16>
    %cst = arith.constant dense<0.000000e+00> : vector<64x16xf32>
    %3 = tpu.matmul %2, %1, %cst {dimension_numbers = #tpu.dot_dimension_numbers<[1], [0], [0], [1], [0, 0, 1, 1], [], []>} : vector<64x8xbf16>, vector<8x16xbf16>, vector<64x16xf32> -> vector<64x16xf32>
    %cst_5 = arith.constant 2.000000e-01 : f32
    %4 = vector.broadcast %cst_5 : f32 to vector<64x16xf32>
    %5 = arith.mulf %4, %3 : vector<64x16xf32>
    %6 = arith.maximumf %3, %5 : vector<64x16xf32>
    %c0_6 = arith.constant 0 : index
    %c0_7 = arith.constant 0 : index
    %7 = vector.load %arg5[%c0_6, %c0_7] : memref<64x64xbf16, #tpu.memory_space<vmem>>, vector<64x64xbf16>
    %8 = arith.truncf %6 : vector<64x16xf32> to vector<64x16xbf16>
    %cst_8 = arith.constant dense<0.000000e+00> : vector<64x16xf32>
    %9 = tpu.matmul %7, %8, %cst_8 {dimension_numbers = #tpu.dot_dimension_numbers<[1], [0], [0], [1], [0, 0, 1, 1], [], []>} : vector<64x64xbf16>, vector<64x16xbf16>, vector<64x16xf32> -> vector<64x16xf32>
    %c0_9 = arith.constant 0 : index
    %c0_10 = arith.constant 0 : index
    %10 = vector.load %arg7[%c0_9, %c0_10] : memref<64x1xf32, #tpu.memory_space<vmem>>, vector<64x1xf32>
    %11 = vector.broadcast %10 : vector<64x1xf32> to vector<64x16xf32>
    %12 = arith.addf %9, %11 : vector<64x16xf32>
    %cst_11 = arith.constant 2.000000e-01 : f32
    %13 = vector.broadcast %cst_11 : f32 to vector<64x16xf32>
    %14 = arith.mulf %13, %12 : vector<64x16xf32>
    %15 = arith.maximumf %12, %14 : vector<64x16xf32>
    %c0_12 = arith.constant 0 : index
    %c0_13 = arith.constant 0 : index
    %16 = vector.load %arg6[%c0_12, %c0_13] : memref<32x64xbf16, #tpu.memory_space<vmem>>, vector<32x64xbf16>
    %17 = arith.truncf %15 : vector<64x16xf32> to vector<64x16xbf16>
    %cst_14 = arith.constant dense<0.000000e+00> : vector<32x16xf32>
    %18 = tpu.matmul %16, %17, %cst_14 {dimension_numbers = #tpu.dot_dimension_numbers<[1], [0], [0], [1], [0, 0, 1, 1], [], []>} : vector<32x64xbf16>, vector<64x16xbf16>, vector<32x16xf32> -> vector<32x16xf32>
    %c0_15 = arith.constant 0 : index
    %c0_16 = arith.constant 0 : index
    %19 = vector.load %arg8[%c0_15, %c0_16] : memref<32x1xf32, #tpu.memory_space<vmem>>, vector<32x1xf32>
    %20 = vector.broadcast %19 : vector<32x1xf32> to vector<32x16xf32>
    %21 = arith.addf %18, %20 : vector<32x16xf32>
    %cst_17 = arith.constant 2.000000e-01 : f32
    %22 = vector.broadcast %cst_17 : f32 to vector<32x16xf32>
    %23 = arith.mulf %22, %21 : vector<32x16xf32>
    %24 = arith.maximumf %21, %23 : vector<32x16xf32>
    %c0_18 = arith.constant 0 : index
    %c0_19 = arith.constant 0 : index
    %25 = vector.load %arg9[%c0_18, %c0_19] : memref<32x1xf32, #tpu.memory_space<vmem>>, vector<32x1xf32>
    %26 = vector.broadcast %25 : vector<32x1xf32> to vector<32x16xf32>
    %27 = arith.mulf %24, %26 : vector<32x16xf32>
    %c0_20 = arith.constant 0 : index
    %c0_21 = arith.constant 0 : index
    %28 = vector.load %arg10[%c0_20, %c0_21] : memref<32x1xf32, #tpu.memory_space<vmem>>, vector<32x1xf32>
    %29 = vector.broadcast %28 : vector<32x1xf32> to vector<32x16xf32>
    %30 = arith.addf %27, %29 : vector<32x16xf32>
    %c0_22 = arith.constant 0 : index
    %c1 = arith.constant 1 : index
    %c0_23 = arith.constant 0 : index
    %c0_24 = arith.constant 0 : index
    %31 = vector.load %arg3[%c0_22, %c1, %c0_23, %c0_24] : memref<1x8x8x16xbf16, #tpu.memory_space<vmem>>, vector<1x1x8x16xbf16>
    %32 = vector.shape_cast %31 : vector<1x1x8x16xbf16> to vector<8x16xbf16>
    %c0_25 = arith.constant 0 : index
    %c0_26 = arith.constant 0 : index
    %33 = vector.load %arg4[%c0_25, %c0_26] : memref<64x8xbf16, #tpu.memory_space<vmem>>, vector<64x8xbf16>
    %cst_27 = arith.constant dense<0.000000e+00> : vector<64x16xf32>
    %34 = tpu.matmul %33, %32, %cst_27 {dimension_numbers = #tpu.dot_dimension_numbers<[1], [0], [0], [1], [0, 0, 1, 1], [], []>} : vector<64x8xbf16>, vector<8x16xbf16>, vector<64x16xf32> -> vector<64x16xf32>
    %cst_28 = arith.constant 2.000000e-01 : f32
    %35 = vector.broadcast %cst_28 : f32 to vector<64x16xf32>
    %36 = arith.mulf %35, %34 : vector<64x16xf32>
    %37 = arith.maximumf %34, %36 : vector<64x16xf32>
    %c0_29 = arith.constant 0 : index
    %c0_30 = arith.constant 0 : index
    %38 = vector.load %arg5[%c0_29, %c0_30] : memref<64x64xbf16, #tpu.memory_space<vmem>>, vector<64x64xbf16>
    %39 = arith.truncf %37 : vector<64x16xf32> to vector<64x16xbf16>
    %cst_31 = arith.constant dense<0.000000e+00> : vector<64x16xf32>
    %40 = tpu.matmul %38, %39, %cst_31 {dimension_numbers = #tpu.dot_dimension_numbers<[1], [0], [0], [1], [0, 0, 1, 1], [], []>} : vector<64x64xbf16>, vector<64x16xbf16>, vector<64x16xf32> -> vector<64x16xf32>
    %c0_32 = arith.constant 0 : index
    %c0_33 = arith.constant 0 : index
    %41 = vector.load %arg7[%c0_32, %c0_33] : memref<64x1xf32, #tpu.memory_space<vmem>>, vector<64x1xf32>
    %42 = vector.broadcast %41 : vector<64x1xf32> to vector<64x16xf32>
    %43 = arith.addf %40, %42 : vector<64x16xf32>
    %cst_34 = arith.constant 2.000000e-01 : f32
    %44 = vector.broadcast %cst_34 : f32 to vector<64x16xf32>
    %45 = arith.mulf %44, %43 : vector<64x16xf32>
    %46 = arith.maximumf %43, %45 : vector<64x16xf32>
    %c0_35 = arith.constant 0 : index
    %c0_36 = arith.constant 0 : index
    %47 = vector.load %arg6[%c0_35, %c0_36] : memref<32x64xbf16, #tpu.memory_space<vmem>>, vector<32x64xbf16>
    %48 = arith.truncf %46 : vector<64x16xf32> to vector<64x16xbf16>
    %cst_37 = arith.constant dense<0.000000e+00> : vector<32x16xf32>
    %49 = tpu.matmul %47, %48, %cst_37 {dimension_numbers = #tpu.dot_dimension_numbers<[1], [0], [0], [1], [0, 0, 1, 1], [], []>} : vector<32x64xbf16>, vector<64x16xbf16>, vector<32x16xf32> -> vector<32x16xf32>
    %c0_38 = arith.constant 0 : index
    %c0_39 = arith.constant 0 : index
    %50 = vector.load %arg8[%c0_38, %c0_39] : memref<32x1xf32, #tpu.memory_space<vmem>>, vector<32x1xf32>
    %51 = vector.broadcast %50 : vector<32x1xf32> to vector<32x16xf32>
    %52 = arith.addf %49, %51 : vector<32x16xf32>
    %cst_40 = arith.constant 2.000000e-01 : f32
    %53 = vector.broadcast %cst_40 : f32 to vector<32x16xf32>
    %54 = arith.mulf %53, %52 : vector<32x16xf32>
    %55 = arith.maximumf %52, %54 : vector<32x16xf32>
    %c0_41 = arith.constant 0 : index
    %c0_42 = arith.constant 0 : index
    %56 = vector.load %arg9[%c0_41, %c0_42] : memref<32x1xf32, #tpu.memory_space<vmem>>, vector<32x1xf32>
    %57 = vector.broadcast %56 : vector<32x1xf32> to vector<32x16xf32>
    %58 = arith.mulf %55, %57 : vector<32x16xf32>
    %c0_43 = arith.constant 0 : index
    %c0_44 = arith.constant 0 : index
    %59 = vector.load %arg10[%c0_43, %c0_44] : memref<32x1xf32, #tpu.memory_space<vmem>>, vector<32x1xf32>
    %60 = vector.broadcast %59 : vector<32x1xf32> to vector<32x16xf32>
    %61 = arith.addf %58, %60 : vector<32x16xf32>
    %62 = arith.maximumf %30, %61 : vector<32x16xf32>
    %c0_45 = arith.constant 0 : index
    %c2 = arith.constant 2 : index
    %c0_46 = arith.constant 0 : index
    %c0_47 = arith.constant 0 : index
    %63 = vector.load %arg3[%c0_45, %c2, %c0_46, %c0_47] : memref<1x8x8x16xbf16, #tpu.memory_space<vmem>>, vector<1x1x8x16xbf16>
    %64 = vector.shape_cast %63 : vector<1x1x8x16xbf16> to vector<8x16xbf16>
    %c0_48 = arith.constant 0 : index
    %c0_49 = arith.constant 0 : index
    %65 = vector.load %arg4[%c0_48, %c0_49] : memref<64x8xbf16, #tpu.memory_space<vmem>>, vector<64x8xbf16>
    %cst_50 = arith.constant dense<0.000000e+00> : vector<64x16xf32>
    %66 = tpu.matmul %65, %64, %cst_50 {dimension_numbers = #tpu.dot_dimension_numbers<[1], [0], [0], [1], [0, 0, 1, 1], [], []>} : vector<64x8xbf16>, vector<8x16xbf16>, vector<64x16xf32> -> vector<64x16xf32>
    %cst_51 = arith.constant 2.000000e-01 : f32
    %67 = vector.broadcast %cst_51 : f32 to vector<64x16xf32>
    %68 = arith.mulf %67, %66 : vector<64x16xf32>
    %69 = arith.maximumf %66, %68 : vector<64x16xf32>
    %c0_52 = arith.constant 0 : index
    %c0_53 = arith.constant 0 : index
    %70 = vector.load %arg5[%c0_52, %c0_53] : memref<64x64xbf16, #tpu.memory_space<vmem>>, vector<64x64xbf16>
    %71 = arith.truncf %69 : vector<64x16xf32> to vector<64x16xbf16>
    %cst_54 = arith.constant dense<0.000000e+00> : vector<64x16xf32>
    %72 = tpu.matmul %70, %71, %cst_54 {dimension_numbers = #tpu.dot_dimension_numbers<[1], [0], [0], [1], [0, 0, 1, 1], [], []>} : vector<64x64xbf16>, vector<64x16xbf16>, vector<64x16xf32> -> vector<64x16xf32>
    %c0_55 = arith.constant 0 : index
    %c0_56 = arith.constant 0 : index
    %73 = vector.load %arg7[%c0_55, %c0_56] : memref<64x1xf32, #tpu.memory_space<vmem>>, vector<64x1xf32>
    %74 = vector.broadcast %73 : vector<64x1xf32> to vector<64x16xf32>
    %75 = arith.addf %72, %74 : vector<64x16xf32>
    %cst_57 = arith.constant 2.000000e-01 : f32
    %76 = vector.broadcast %cst_57 : f32 to vector<64x16xf32>
    %77 = arith.mulf %76, %75 : vector<64x16xf32>
    %78 = arith.maximumf %75, %77 : vector<64x16xf32>
    %c0_58 = arith.constant 0 : index
    %c0_59 = arith.constant 0 : index
    %79 = vector.load %arg6[%c0_58, %c0_59] : memref<32x64xbf16, #tpu.memory_space<vmem>>, vector<32x64xbf16>
    %80 = arith.truncf %78 : vector<64x16xf32> to vector<64x16xbf16>
    %cst_60 = arith.constant dense<0.000000e+00> : vector<32x16xf32>
    %81 = tpu.matmul %79, %80, %cst_60 {dimension_numbers = #tpu.dot_dimension_numbers<[1], [0], [0], [1], [0, 0, 1, 1], [], []>} : vector<32x64xbf16>, vector<64x16xbf16>, vector<32x16xf32> -> vector<32x16xf32>
    %c0_61 = arith.constant 0 : index
    %c0_62 = arith.constant 0 : index
    %82 = vector.load %arg8[%c0_61, %c0_62] : memref<32x1xf32, #tpu.memory_space<vmem>>, vector<32x1xf32>
    %83 = vector.broadcast %82 : vector<32x1xf32> to vector<32x16xf32>
    %84 = arith.addf %81, %83 : vector<32x16xf32>
    %cst_63 = arith.constant 2.000000e-01 : f32
    %85 = vector.broadcast %cst_63 : f32 to vector<32x16xf32>
    %86 = arith.mulf %85, %84 : vector<32x16xf32>
    %87 = arith.maximumf %84, %86 : vector<32x16xf32>
    %c0_64 = arith.constant 0 : index
    %c0_65 = arith.constant 0 : index
    %88 = vector.load %arg9[%c0_64, %c0_65] : memref<32x1xf32, #tpu.memory_space<vmem>>, vector<32x1xf32>
    %89 = vector.broadcast %88 : vector<32x1xf32> to vector<32x16xf32>
    %90 = arith.mulf %87, %89 : vector<32x16xf32>
    %c0_66 = arith.constant 0 : index
    %c0_67 = arith.constant 0 : index
    %91 = vector.load %arg10[%c0_66, %c0_67] : memref<32x1xf32, #tpu.memory_space<vmem>>, vector<32x1xf32>
    %92 = vector.broadcast %91 : vector<32x1xf32> to vector<32x16xf32>
    %93 = arith.addf %90, %92 : vector<32x16xf32>
    %94 = arith.maximumf %62, %93 : vector<32x16xf32>
    %c0_68 = arith.constant 0 : index
    %c3 = arith.constant 3 : index
    %c0_69 = arith.constant 0 : index
    %c0_70 = arith.constant 0 : index
    %95 = vector.load %arg3[%c0_68, %c3, %c0_69, %c0_70] : memref<1x8x8x16xbf16, #tpu.memory_space<vmem>>, vector<1x1x8x16xbf16>
    %96 = vector.shape_cast %95 : vector<1x1x8x16xbf16> to vector<8x16xbf16>
    %c0_71 = arith.constant 0 : index
    %c0_72 = arith.constant 0 : index
    %97 = vector.load %arg4[%c0_71, %c0_72] : memref<64x8xbf16, #tpu.memory_space<vmem>>, vector<64x8xbf16>
    %cst_73 = arith.constant dense<0.000000e+00> : vector<64x16xf32>
    %98 = tpu.matmul %97, %96, %cst_73 {dimension_numbers = #tpu.dot_dimension_numbers<[1], [0], [0], [1], [0, 0, 1, 1], [], []>} : vector<64x8xbf16>, vector<8x16xbf16>, vector<64x16xf32> -> vector<64x16xf32>
    %cst_74 = arith.constant 2.000000e-01 : f32
    %99 = vector.broadcast %cst_74 : f32 to vector<64x16xf32>
    %100 = arith.mulf %99, %98 : vector<64x16xf32>
    %101 = arith.maximumf %98, %100 : vector<64x16xf32>
    %c0_75 = arith.constant 0 : index
    %c0_76 = arith.constant 0 : index
    %102 = vector.load %arg5[%c0_75, %c0_76] : memref<64x64xbf16, #tpu.memory_space<vmem>>, vector<64x64xbf16>
    %103 = arith.truncf %101 : vector<64x16xf32> to vector<64x16xbf16>
    %cst_77 = arith.constant dense<0.000000e+00> : vector<64x16xf32>
    %104 = tpu.matmul %102, %103, %cst_77 {dimension_numbers = #tpu.dot_dimension_numbers<[1], [0], [0], [1], [0, 0, 1, 1], [], []>} : vector<64x64xbf16>, vector<64x16xbf16>, vector<64x16xf32> -> vector<64x16xf32>
    %c0_78 = arith.constant 0 : index
    %c0_79 = arith.constant 0 : index
    %105 = vector.load %arg7[%c0_78, %c0_79] : memref<64x1xf32, #tpu.memory_space<vmem>>, vector<64x1xf32>
    %106 = vector.broadcast %105 : vector<64x1xf32> to vector<64x16xf32>
    %107 = arith.addf %104, %106 : vector<64x16xf32>
    %cst_80 = arith.constant 2.000000e-01 : f32
    %108 = vector.broadcast %cst_80 : f32 to vector<64x16xf32>
    %109 = arith.mulf %108, %107 : vector<64x16xf32>
    %110 = arith.maximumf %107, %109 : vector<64x16xf32>
    %c0_81 = arith.constant 0 : index
    %c0_82 = arith.constant 0 : index
    %111 = vector.load %arg6[%c0_81, %c0_82] : memref<32x64xbf16, #tpu.memory_space<vmem>>, vector<32x64xbf16>
    %112 = arith.truncf %110 : vector<64x16xf32> to vector<64x16xbf16>
    %cst_83 = arith.constant dense<0.000000e+00> : vector<32x16xf32>
    %113 = tpu.matmul %111, %112, %cst_83 {dimension_numbers = #tpu.dot_dimension_numbers<[1], [0], [0], [1], [0, 0, 1, 1], [], []>} : vector<32x64xbf16>, vector<64x16xbf16>, vector<32x16xf32> -> vector<32x16xf32>
    %c0_84 = arith.constant 0 : index
    %c0_85 = arith.constant 0 : index
    %114 = vector.load %arg8[%c0_84, %c0_85] : memref<32x1xf32, #tpu.memory_space<vmem>>, vector<32x1xf32>
    %115 = vector.broadcast %114 : vector<32x1xf32> to vector<32x16xf32>
    %116 = arith.addf %113, %115 : vector<32x16xf32>
    %cst_86 = arith.constant 2.000000e-01 : f32
    %117 = vector.broadcast %cst_86 : f32 to vector<32x16xf32>
    %118 = arith.mulf %117, %116 : vector<32x16xf32>
    %119 = arith.maximumf %116, %118 : vector<32x16xf32>
    %c0_87 = arith.constant 0 : index
    %c0_88 = arith.constant 0 : index
    %120 = vector.load %arg9[%c0_87, %c0_88] : memref<32x1xf32, #tpu.memory_space<vmem>>, vector<32x1xf32>
    %121 = vector.broadcast %120 : vector<32x1xf32> to vector<32x16xf32>
    %122 = arith.mulf %119, %121 : vector<32x16xf32>
    %c0_89 = arith.constant 0 : index
    %c0_90 = arith.constant 0 : index
    %123 = vector.load %arg10[%c0_89, %c0_90] : memref<32x1xf32, #tpu.memory_space<vmem>>, vector<32x1xf32>
    %124 = vector.broadcast %123 : vector<32x1xf32> to vector<32x16xf32>
    %125 = arith.addf %122, %124 : vector<32x16xf32>
    %126 = arith.maximumf %94, %125 : vector<32x16xf32>
    %c0_91 = arith.constant 0 : index
    %c4 = arith.constant 4 : index
    %c0_92 = arith.constant 0 : index
    %c0_93 = arith.constant 0 : index
    %127 = vector.load %arg3[%c0_91, %c4, %c0_92, %c0_93] : memref<1x8x8x16xbf16, #tpu.memory_space<vmem>>, vector<1x1x8x16xbf16>
    %128 = vector.shape_cast %127 : vector<1x1x8x16xbf16> to vector<8x16xbf16>
    %c0_94 = arith.constant 0 : index
    %c0_95 = arith.constant 0 : index
    %129 = vector.load %arg4[%c0_94, %c0_95] : memref<64x8xbf16, #tpu.memory_space<vmem>>, vector<64x8xbf16>
    %cst_96 = arith.constant dense<0.000000e+00> : vector<64x16xf32>
    %130 = tpu.matmul %129, %128, %cst_96 {dimension_numbers = #tpu.dot_dimension_numbers<[1], [0], [0], [1], [0, 0, 1, 1], [], []>} : vector<64x8xbf16>, vector<8x16xbf16>, vector<64x16xf32> -> vector<64x16xf32>
    %cst_97 = arith.constant 2.000000e-01 : f32
    %131 = vector.broadcast %cst_97 : f32 to vector<64x16xf32>
    %132 = arith.mulf %131, %130 : vector<64x16xf32>
    %133 = arith.maximumf %130, %132 : vector<64x16xf32>
    %c0_98 = arith.constant 0 : index
    %c0_99 = arith.constant 0 : index
    %134 = vector.load %arg5[%c0_98, %c0_99] : memref<64x64xbf16, #tpu.memory_space<vmem>>, vector<64x64xbf16>
    %135 = arith.truncf %133 : vector<64x16xf32> to vector<64x16xbf16>
    %cst_100 = arith.constant dense<0.000000e+00> : vector<64x16xf32>
    %136 = tpu.matmul %134, %135, %cst_100 {dimension_numbers = #tpu.dot_dimension_numbers<[1], [0], [0], [1], [0, 0, 1, 1], [], []>} : vector<64x64xbf16>, vector<64x16xbf16>, vector<64x16xf32> -> vector<64x16xf32>
    %c0_101 = arith.constant 0 : index
    %c0_102 = arith.constant 0 : index
    %137 = vector.load %arg7[%c0_101, %c0_102] : memref<64x1xf32, #tpu.memory_space<vmem>>, vector<64x1xf32>
    %138 = vector.broadcast %137 : vector<64x1xf32> to vector<64x16xf32>
    %139 = arith.addf %136, %138 : vector<64x16xf32>
    %cst_103 = arith.constant 2.000000e-01 : f32
    %140 = vector.broadcast %cst_103 : f32 to vector<64x16xf32>
    %141 = arith.mulf %140, %139 : vector<64x16xf32>
    %142 = arith.maximumf %139, %141 : vector<64x16xf32>
    %c0_104 = arith.constant 0 : index
    %c0_105 = arith.constant 0 : index
    %143 = vector.load %arg6[%c0_104, %c0_105] : memref<32x64xbf16, #tpu.memory_space<vmem>>, vector<32x64xbf16>
    %144 = arith.truncf %142 : vector<64x16xf32> to vector<64x16xbf16>
    %cst_106 = arith.constant dense<0.000000e+00> : vector<32x16xf32>
    %145 = tpu.matmul %143, %144, %cst_106 {dimension_numbers = #tpu.dot_dimension_numbers<[1], [0], [0], [1], [0, 0, 1, 1], [], []>} : vector<32x64xbf16>, vector<64x16xbf16>, vector<32x16xf32> -> vector<32x16xf32>
    %c0_107 = arith.constant 0 : index
    %c0_108 = arith.constant 0 : index
    %146 = vector.load %arg8[%c0_107, %c0_108] : memref<32x1xf32, #tpu.memory_space<vmem>>, vector<32x1xf32>
    %147 = vector.broadcast %146 : vector<32x1xf32> to vector<32x16xf32>
    %148 = arith.addf %145, %147 : vector<32x16xf32>
    %cst_109 = arith.constant 2.000000e-01 : f32
    %149 = vector.broadcast %cst_109 : f32 to vector<32x16xf32>
    %150 = arith.mulf %149, %148 : vector<32x16xf32>
    %151 = arith.maximumf %148, %150 : vector<32x16xf32>
    %c0_110 = arith.constant 0 : index
    %c0_111 = arith.constant 0 : index
    %152 = vector.load %arg9[%c0_110, %c0_111] : memref<32x1xf32, #tpu.memory_space<vmem>>, vector<32x1xf32>
    %153 = vector.broadcast %152 : vector<32x1xf32> to vector<32x16xf32>
    %154 = arith.mulf %151, %153 : vector<32x16xf32>
    %c0_112 = arith.constant 0 : index
    %c0_113 = arith.constant 0 : index
    %155 = vector.load %arg10[%c0_112, %c0_113] : memref<32x1xf32, #tpu.memory_space<vmem>>, vector<32x1xf32>
    %156 = vector.broadcast %155 : vector<32x1xf32> to vector<32x16xf32>
    %157 = arith.addf %154, %156 : vector<32x16xf32>
    %158 = arith.maximumf %126, %157 : vector<32x16xf32>
    %c0_114 = arith.constant 0 : index
    %c5 = arith.constant 5 : index
    %c0_115 = arith.constant 0 : index
    %c0_116 = arith.constant 0 : index
    %159 = vector.load %arg3[%c0_114, %c5, %c0_115, %c0_116] : memref<1x8x8x16xbf16, #tpu.memory_space<vmem>>, vector<1x1x8x16xbf16>
    %160 = vector.shape_cast %159 : vector<1x1x8x16xbf16> to vector<8x16xbf16>
    %c0_117 = arith.constant 0 : index
    %c0_118 = arith.constant 0 : index
    %161 = vector.load %arg4[%c0_117, %c0_118] : memref<64x8xbf16, #tpu.memory_space<vmem>>, vector<64x8xbf16>
    %cst_119 = arith.constant dense<0.000000e+00> : vector<64x16xf32>
    %162 = tpu.matmul %161, %160, %cst_119 {dimension_numbers = #tpu.dot_dimension_numbers<[1], [0], [0], [1], [0, 0, 1, 1], [], []>} : vector<64x8xbf16>, vector<8x16xbf16>, vector<64x16xf32> -> vector<64x16xf32>
    %cst_120 = arith.constant 2.000000e-01 : f32
    %163 = vector.broadcast %cst_120 : f32 to vector<64x16xf32>
    %164 = arith.mulf %163, %162 : vector<64x16xf32>
    %165 = arith.maximumf %162, %164 : vector<64x16xf32>
    %c0_121 = arith.constant 0 : index
    %c0_122 = arith.constant 0 : index
    %166 = vector.load %arg5[%c0_121, %c0_122] : memref<64x64xbf16, #tpu.memory_space<vmem>>, vector<64x64xbf16>
    %167 = arith.truncf %165 : vector<64x16xf32> to vector<64x16xbf16>
    %cst_123 = arith.constant dense<0.000000e+00> : vector<64x16xf32>
    %168 = tpu.matmul %166, %167, %cst_123 {dimension_numbers = #tpu.dot_dimension_numbers<[1], [0], [0], [1], [0, 0, 1, 1], [], []>} : vector<64x64xbf16>, vector<64x16xbf16>, vector<64x16xf32> -> vector<64x16xf32>
    %c0_124 = arith.constant 0 : index
    %c0_125 = arith.constant 0 : index
    %169 = vector.load %arg7[%c0_124, %c0_125] : memref<64x1xf32, #tpu.memory_space<vmem>>, vector<64x1xf32>
    %170 = vector.broadcast %169 : vector<64x1xf32> to vector<64x16xf32>
    %171 = arith.addf %168, %170 : vector<64x16xf32>
    %cst_126 = arith.constant 2.000000e-01 : f32
    %172 = vector.broadcast %cst_126 : f32 to vector<64x16xf32>
    %173 = arith.mulf %172, %171 : vector<64x16xf32>
    %174 = arith.maximumf %171, %173 : vector<64x16xf32>
    %c0_127 = arith.constant 0 : index
    %c0_128 = arith.constant 0 : index
    %175 = vector.load %arg6[%c0_127, %c0_128] : memref<32x64xbf16, #tpu.memory_space<vmem>>, vector<32x64xbf16>
    %176 = arith.truncf %174 : vector<64x16xf32> to vector<64x16xbf16>
    %cst_129 = arith.constant dense<0.000000e+00> : vector<32x16xf32>
    %177 = tpu.matmul %175, %176, %cst_129 {dimension_numbers = #tpu.dot_dimension_numbers<[1], [0], [0], [1], [0, 0, 1, 1], [], []>} : vector<32x64xbf16>, vector<64x16xbf16>, vector<32x16xf32> -> vector<32x16xf32>
    %c0_130 = arith.constant 0 : index
    %c0_131 = arith.constant 0 : index
    %178 = vector.load %arg8[%c0_130, %c0_131] : memref<32x1xf32, #tpu.memory_space<vmem>>, vector<32x1xf32>
    %179 = vector.broadcast %178 : vector<32x1xf32> to vector<32x16xf32>
    %180 = arith.addf %177, %179 : vector<32x16xf32>
    %cst_132 = arith.constant 2.000000e-01 : f32
    %181 = vector.broadcast %cst_132 : f32 to vector<32x16xf32>
    %182 = arith.mulf %181, %180 : vector<32x16xf32>
    %183 = arith.maximumf %180, %182 : vector<32x16xf32>
    %c0_133 = arith.constant 0 : index
    %c0_134 = arith.constant 0 : index
    %184 = vector.load %arg9[%c0_133, %c0_134] : memref<32x1xf32, #tpu.memory_space<vmem>>, vector<32x1xf32>
    %185 = vector.broadcast %184 : vector<32x1xf32> to vector<32x16xf32>
    %186 = arith.mulf %183, %185 : vector<32x16xf32>
    %c0_135 = arith.constant 0 : index
    %c0_136 = arith.constant 0 : index
    %187 = vector.load %arg10[%c0_135, %c0_136] : memref<32x1xf32, #tpu.memory_space<vmem>>, vector<32x1xf32>
    %188 = vector.broadcast %187 : vector<32x1xf32> to vector<32x16xf32>
    %189 = arith.addf %186, %188 : vector<32x16xf32>
    %190 = arith.maximumf %158, %189 : vector<32x16xf32>
    %c0_137 = arith.constant 0 : index
    %c6 = arith.constant 6 : index
    %c0_138 = arith.constant 0 : index
    %c0_139 = arith.constant 0 : index
    %191 = vector.load %arg3[%c0_137, %c6, %c0_138, %c0_139] : memref<1x8x8x16xbf16, #tpu.memory_space<vmem>>, vector<1x1x8x16xbf16>
    %192 = vector.shape_cast %191 : vector<1x1x8x16xbf16> to vector<8x16xbf16>
    %c0_140 = arith.constant 0 : index
    %c0_141 = arith.constant 0 : index
    %193 = vector.load %arg4[%c0_140, %c0_141] : memref<64x8xbf16, #tpu.memory_space<vmem>>, vector<64x8xbf16>
    %cst_142 = arith.constant dense<0.000000e+00> : vector<64x16xf32>
    %194 = tpu.matmul %193, %192, %cst_142 {dimension_numbers = #tpu.dot_dimension_numbers<[1], [0], [0], [1], [0, 0, 1, 1], [], []>} : vector<64x8xbf16>, vector<8x16xbf16>, vector<64x16xf32> -> vector<64x16xf32>
    %cst_143 = arith.constant 2.000000e-01 : f32
    %195 = vector.broadcast %cst_143 : f32 to vector<64x16xf32>
    %196 = arith.mulf %195, %194 : vector<64x16xf32>
    %197 = arith.maximumf %194, %196 : vector<64x16xf32>
    %c0_144 = arith.constant 0 : index
    %c0_145 = arith.constant 0 : index
    %198 = vector.load %arg5[%c0_144, %c0_145] : memref<64x64xbf16, #tpu.memory_space<vmem>>, vector<64x64xbf16>
    %199 = arith.truncf %197 : vector<64x16xf32> to vector<64x16xbf16>
    %cst_146 = arith.constant dense<0.000000e+00> : vector<64x16xf32>
    %200 = tpu.matmul %198, %199, %cst_146 {dimension_numbers = #tpu.dot_dimension_numbers<[1], [0], [0], [1], [0, 0, 1, 1], [], []>} : vector<64x64xbf16>, vector<64x16xbf16>, vector<64x16xf32> -> vector<64x16xf32>
    %c0_147 = arith.constant 0 : index
    %c0_148 = arith.constant 0 : index
    %201 = vector.load %arg7[%c0_147, %c0_148] : memref<64x1xf32, #tpu.memory_space<vmem>>, vector<64x1xf32>
    %202 = vector.broadcast %201 : vector<64x1xf32> to vector<64x16xf32>
    %203 = arith.addf %200, %202 : vector<64x16xf32>
    %cst_149 = arith.constant 2.000000e-01 : f32
    %204 = vector.broadcast %cst_149 : f32 to vector<64x16xf32>
    %205 = arith.mulf %204, %203 : vector<64x16xf32>
    %206 = arith.maximumf %203, %205 : vector<64x16xf32>
    %c0_150 = arith.constant 0 : index
    %c0_151 = arith.constant 0 : index
    %207 = vector.load %arg6[%c0_150, %c0_151] : memref<32x64xbf16, #tpu.memory_space<vmem>>, vector<32x64xbf16>
    %208 = arith.truncf %206 : vector<64x16xf32> to vector<64x16xbf16>
    %cst_152 = arith.constant dense<0.000000e+00> : vector<32x16xf32>
    %209 = tpu.matmul %207, %208, %cst_152 {dimension_numbers = #tpu.dot_dimension_numbers<[1], [0], [0], [1], [0, 0, 1, 1], [], []>} : vector<32x64xbf16>, vector<64x16xbf16>, vector<32x16xf32> -> vector<32x16xf32>
    %c0_153 = arith.constant 0 : index
    %c0_154 = arith.constant 0 : index
    %210 = vector.load %arg8[%c0_153, %c0_154] : memref<32x1xf32, #tpu.memory_space<vmem>>, vector<32x1xf32>
    %211 = vector.broadcast %210 : vector<32x1xf32> to vector<32x16xf32>
    %212 = arith.addf %209, %211 : vector<32x16xf32>
    %cst_155 = arith.constant 2.000000e-01 : f32
    %213 = vector.broadcast %cst_155 : f32 to vector<32x16xf32>
    %214 = arith.mulf %213, %212 : vector<32x16xf32>
    %215 = arith.maximumf %212, %214 : vector<32x16xf32>
    %c0_156 = arith.constant 0 : index
    %c0_157 = arith.constant 0 : index
    %216 = vector.load %arg9[%c0_156, %c0_157] : memref<32x1xf32, #tpu.memory_space<vmem>>, vector<32x1xf32>
    %217 = vector.broadcast %216 : vector<32x1xf32> to vector<32x16xf32>
    %218 = arith.mulf %215, %217 : vector<32x16xf32>
    %c0_158 = arith.constant 0 : index
    %c0_159 = arith.constant 0 : index
    %219 = vector.load %arg10[%c0_158, %c0_159] : memref<32x1xf32, #tpu.memory_space<vmem>>, vector<32x1xf32>
    %220 = vector.broadcast %219 : vector<32x1xf32> to vector<32x16xf32>
    %221 = arith.addf %218, %220 : vector<32x16xf32>
    %222 = arith.maximumf %190, %221 : vector<32x16xf32>
    %c0_160 = arith.constant 0 : index
    %c7 = arith.constant 7 : index
    %c0_161 = arith.constant 0 : index
    %c0_162 = arith.constant 0 : index
    %223 = vector.load %arg3[%c0_160, %c7, %c0_161, %c0_162] : memref<1x8x8x16xbf16, #tpu.memory_space<vmem>>, vector<1x1x8x16xbf16>
    %224 = vector.shape_cast %223 : vector<1x1x8x16xbf16> to vector<8x16xbf16>
    %c0_163 = arith.constant 0 : index
    %c0_164 = arith.constant 0 : index
    %225 = vector.load %arg4[%c0_163, %c0_164] : memref<64x8xbf16, #tpu.memory_space<vmem>>, vector<64x8xbf16>
    %cst_165 = arith.constant dense<0.000000e+00> : vector<64x16xf32>
    %226 = tpu.matmul %225, %224, %cst_165 {dimension_numbers = #tpu.dot_dimension_numbers<[1], [0], [0], [1], [0, 0, 1, 1], [], []>} : vector<64x8xbf16>, vector<8x16xbf16>, vector<64x16xf32> -> vector<64x16xf32>
    %cst_166 = arith.constant 2.000000e-01 : f32
    %227 = vector.broadcast %cst_166 : f32 to vector<64x16xf32>
    %228 = arith.mulf %227, %226 : vector<64x16xf32>
    %229 = arith.maximumf %226, %228 : vector<64x16xf32>
    %c0_167 = arith.constant 0 : index
    %c0_168 = arith.constant 0 : index
    %230 = vector.load %arg5[%c0_167, %c0_168] : memref<64x64xbf16, #tpu.memory_space<vmem>>, vector<64x64xbf16>
    %231 = arith.truncf %229 : vector<64x16xf32> to vector<64x16xbf16>
    %cst_169 = arith.constant dense<0.000000e+00> : vector<64x16xf32>
    %232 = tpu.matmul %230, %231, %cst_169 {dimension_numbers = #tpu.dot_dimension_numbers<[1], [0], [0], [1], [0, 0, 1, 1], [], []>} : vector<64x64xbf16>, vector<64x16xbf16>, vector<64x16xf32> -> vector<64x16xf32>
    %c0_170 = arith.constant 0 : index
    %c0_171 = arith.constant 0 : index
    %233 = vector.load %arg7[%c0_170, %c0_171] : memref<64x1xf32, #tpu.memory_space<vmem>>, vector<64x1xf32>
    %234 = vector.broadcast %233 : vector<64x1xf32> to vector<64x16xf32>
    %235 = arith.addf %232, %234 : vector<64x16xf32>
    %cst_172 = arith.constant 2.000000e-01 : f32
    %236 = vector.broadcast %cst_172 : f32 to vector<64x16xf32>
    %237 = arith.mulf %236, %235 : vector<64x16xf32>
    %238 = arith.maximumf %235, %237 : vector<64x16xf32>
    %c0_173 = arith.constant 0 : index
    %c0_174 = arith.constant 0 : index
    %239 = vector.load %arg6[%c0_173, %c0_174] : memref<32x64xbf16, #tpu.memory_space<vmem>>, vector<32x64xbf16>
    %240 = arith.truncf %238 : vector<64x16xf32> to vector<64x16xbf16>
    %cst_175 = arith.constant dense<0.000000e+00> : vector<32x16xf32>
    %241 = tpu.matmul %239, %240, %cst_175 {dimension_numbers = #tpu.dot_dimension_numbers<[1], [0], [0], [1], [0, 0, 1, 1], [], []>} : vector<32x64xbf16>, vector<64x16xbf16>, vector<32x16xf32> -> vector<32x16xf32>
    %c0_176 = arith.constant 0 : index
    %c0_177 = arith.constant 0 : index
    %242 = vector.load %arg8[%c0_176, %c0_177] : memref<32x1xf32, #tpu.memory_space<vmem>>, vector<32x1xf32>
    %243 = vector.broadcast %242 : vector<32x1xf32> to vector<32x16xf32>
    %244 = arith.addf %241, %243 : vector<32x16xf32>
    %cst_178 = arith.constant 2.000000e-01 : f32
    %245 = vector.broadcast %cst_178 : f32 to vector<32x16xf32>
    %246 = arith.mulf %245, %244 : vector<32x16xf32>
    %247 = arith.maximumf %244, %246 : vector<32x16xf32>
    %c0_179 = arith.constant 0 : index
    %c0_180 = arith.constant 0 : index
    %248 = vector.load %arg9[%c0_179, %c0_180] : memref<32x1xf32, #tpu.memory_space<vmem>>, vector<32x1xf32>
    %249 = vector.broadcast %248 : vector<32x1xf32> to vector<32x16xf32>
    %250 = arith.mulf %247, %249 : vector<32x16xf32>
    %c0_181 = arith.constant 0 : index
    %c0_182 = arith.constant 0 : index
    %251 = vector.load %arg10[%c0_181, %c0_182] : memref<32x1xf32, #tpu.memory_space<vmem>>, vector<32x1xf32>
    %252 = vector.broadcast %251 : vector<32x1xf32> to vector<32x16xf32>
    %253 = arith.addf %250, %252 : vector<32x16xf32>
    %254 = arith.maximumf %222, %253 : vector<32x16xf32>
    %c0_i32 = arith.constant 0 : i32
    %255 = arith.cmpi eq, %arg2, %c0_i32 : i32
    %256 = arith.extui %255 : i1 to i32
    %c0_i32_183 = arith.constant 0 : i32
    %257 = arith.cmpi ne, %256, %c0_i32_183 : i32
    scf.if %257 {
      %c0_186 = arith.constant 0 : index
      %c0_187 = arith.constant 0 : index
      %c0_188 = arith.constant 0 : index
      %261 = vector.load %arg11[%c0_186, %c0_187, %c0_188] : memref<1x32x16xf32, #tpu.memory_space<vmem>>, vector<1x32x16xf32>
      %262 = vector.shape_cast %261 : vector<1x32x16xf32> to vector<32x16xf32>
      %263 = vector.shape_cast %254 : vector<32x16xf32> to vector<1x32x16xf32>
      tpu.vector_store %arg11[%c0_186, %c0_187, %c0_188], %263 {strides = array<i32>} : memref<1x32x16xf32, #tpu.memory_space<vmem>>, vector<1x32x16xf32>,
    } else {
    }
    %c0_i32_184 = arith.constant 0 : i32
    %258 = arith.cmpi sgt, %arg2, %c0_i32_184 : i32
    %259 = arith.extui %258 : i1 to i32
    %c0_i32_185 = arith.constant 0 : i32
    %260 = arith.cmpi ne, %259, %c0_i32_185 : i32
    scf.if %260 {
      %c0_186 = arith.constant 0 : index
      %c0_187 = arith.constant 0 : index
      %c0_188 = arith.constant 0 : index
      %261 = vector.load %arg11[%c0_186, %c0_187, %c0_188] : memref<1x32x16xf32, #tpu.memory_space<vmem>>, vector<1x32x16xf32>
      %262 = vector.shape_cast %261 : vector<1x32x16xf32> to vector<32x16xf32>
      %263 = arith.maximumf %262, %254 : vector<32x16xf32>
      %c0_189 = arith.constant 0 : index
      %c0_190 = arith.constant 0 : index
      %c0_191 = arith.constant 0 : index
      %264 = vector.load %arg11[%c0_189, %c0_190, %c0_191] : memref<1x32x16xf32, #tpu.memory_space<vmem>>, vector<1x32x16xf32>
      %265 = vector.shape_cast %264 : vector<1x32x16xf32> to vector<32x16xf32>
      %266 = vector.shape_cast %263 : vector<32x16xf32> to vector<1x32x16xf32>
      tpu.vector_store %arg11[%c0_189, %c0_190, %c0_191], %266 {strides = array<i32>} : memref<1x32x16xf32, #tpu.memory_space<vmem>>, vector<1x32x16xf32>,
    } else {
    }
    return
  }
  func.func @transform_0(%arg0: i32, %arg1: i32, %arg2: i32) -> (i32, i32, i32, i32) {
    %c0_i32 = arith.constant 0 : i32
    %c0_i32_0 = arith.constant 0 : i32
    return %arg0, %arg2, %c0_i32, %arg1 : i32, i32, i32, i32
  }
  func.func @transform_1(%arg0: i32, %arg1: i32, %arg2: i32) -> (i32, i32) {
    %c0_i32 = arith.constant 0 : i32
    %c0_i32_0 = arith.constant 0 : i32
    %c0_i32_1 = arith.constant 0 : i32
    return %c0_i32, %c0_i32_0 : i32, i32
  }
  func.func @transform_2(%arg0: i32, %arg1: i32, %arg2: i32) -> (i32, i32) {
    %c0_i32 = arith.constant 0 : i32
    %c0_i32_0 = arith.constant 0 : i32
    %c0_i32_1 = arith.constant 0 : i32
    return %c0_i32, %c0_i32_0 : i32, i32
  }
  func.func @transform_3(%arg0: i32, %arg1: i32, %arg2: i32) -> (i32, i32) {
    %c0_i32 = arith.constant 0 : i32
    %c0_i32_0 = arith.constant 0 : i32
    %c0_i32_1 = arith.constant 0 : i32
    return %c0_i32, %c0_i32_0 : i32, i32
  }
  func.func @transform_4(%arg0: i32, %arg1: i32, %arg2: i32) -> (i32, i32) {
    %c0_i32 = arith.constant 0 : i32
    %c0_i32_0 = arith.constant 0 : i32
    %c0_i32_1 = arith.constant 0 : i32
    return %c0_i32, %c0_i32_0 : i32, i32
  }
  func.func @transform_5(%arg0: i32, %arg1: i32, %arg2: i32) -> (i32, i32) {
    %c0_i32 = arith.constant 0 : i32
    %c0_i32_0 = arith.constant 0 : i32
    %c0_i32_1 = arith.constant 0 : i32
    return %c0_i32, %c0_i32_0 : i32, i32
  }
  func.func @transform_6(%arg0: i32, %arg1: i32, %arg2: i32) -> (i32, i32) {
    %c0_i32 = arith.constant 0 : i32
    %c0_i32_0 = arith.constant 0 : i32
    %c0_i32_1 = arith.constant 0 : i32
    return %c0_i32, %c0_i32_0 : i32, i32
  }
  func.func @transform_7(%arg0: i32, %arg1: i32, %arg2: i32) -> (i32, i32) {
    %c0_i32 = arith.constant 0 : i32
    %c0_i32_0 = arith.constant 0 : i32
    %c0_i32_1 = arith.constant 0 : i32
    return %c0_i32, %c0_i32_0 : i32, i32
  }
  func.func @transform_8(%arg0: i32, %arg1: i32, %arg2: i32) -> (i32, i32, i32) {
    %c0_i32 = arith.constant 0 : i32
    %c0_i32_0 = arith.constant 0 : i32
    return %arg0, %c0_i32, %arg1 : i32, i32, i32
  }
}

</mosaic_0001>

<llo_original>
// kernel: tpu_custom_call.1
$region0: #{tpu_custom_call.1}
  #allocation0 [shape = 'u32[]', space=smem, size = 0x4, offset = 0x4, fixed_abs, tag = 'smem constant byte address 0x4 - core index']
  #allocation1 [shape = 'u32[72,128]{1,0:T(1,128)}', space=vmem, size = 0x9000, scoped, tag = 'internal scratch']
  %s0 = inlined_call_operand.vmem [shape: bf16[2,8,8,16], index: 0, kind: input, shape index: {}]
  %s1 = inlined_call_operand.vmem [shape: bf16[64,8], index: 1, kind: input, shape index: {}]
  %s2 = inlined_call_operand.vmem [shape: bf16[64,64], index: 2, kind: input, shape index: {}]
  %s3 = inlined_call_operand.vmem [shape: bf16[32,64], index: 3, kind: input, shape index: {}]
  %s4 = inlined_call_operand.vmem [shape: f32[64,1], index: 4, kind: input, shape index: {}]
  %s5 = inlined_call_operand.vmem [shape: f32[32,1], index: 5, kind: input, shape index: {}]
  %s6 = inlined_call_operand.vmem [shape: f32[32,1], index: 6, kind: input, shape index: {}]
  %s7 = inlined_call_operand.vmem [shape: f32[32,1], index: 7, kind: input, shape index: {}]
  %s8 = inlined_call_operand.vmem [shape: f32[2,32,16], index: 8, kind: output, shape index: {}]
  %s9 = sld [smem:[#allocation0]]
  $region73: #{tpu_custom_call.1} parent=0
    _
  %s11 = ssub.s32 1, %s9
  %s12 = scalar_select 0, %s11, %s9
  loop: start=0, step=1, limit=4
  $region2: #{tpu_custom_call.1} parent=0 // loop_pre_header
    _
  $region3: #{tpu_custom_call.1} parent=0 // loop_header
    %s14 = sphi 0, %s18
    %p15 = scmp.ge.s32.totalorder %s14, 4
    %s21 = sphi 0, %s40
    %s22 = sphi 0, %s36
    %s23 = sphi 0, %s32
    %s24 = sphi 0, %s21
    %s25 = sphi 0, %s22
    %s26 = sphi 0, %s23
    %s27 = sphi 0, %s24
    %s28 = sphi 0, %s25
    %s29 = sphi 0, %s26
    %s47 = sphi 0, %s49
    %s50 = sphi 0, %s47
    %s51 = sphi 0, %s50
    %s67 = sphi 0, %s51
    %s71 = sphi 0, %s71
    %s73 = sphi 0, %s71
    %s74 = sphi 0, %s73
    %s88 = sphi 0, %s74
    %s92 = sphi 0, %s92
    %s94 = sphi 0, %s92
    %s95 = sphi 0, %s94
    %s109 = sphi 0, %s95
    %s113 = sphi 0, %s113
    %s115 = sphi 0, %s113
    %s116 = sphi 0, %s115
    %s130 = sphi 0, %s116
    %s134 = sphi 0, %s134
    %s136 = sphi 0, %s134
    %s137 = sphi 0, %s136
    %s151 = sphi 0, %s137
    %s155 = sphi 0, %s155
    %s157 = sphi 0, %s155
    %s158 = sphi 0, %s157
    %s172 = sphi 0, %s158
    %s176 = sphi 0, %s176
    %s178 = sphi 0, %s176
    %s179 = sphi 0, %s178
    %s193 = sphi 0, %s179
    %s197 = sphi 0, %s197
    %s199 = sphi 0, %s197
    %s200 = sphi 0, %s199
    %s214 = sphi 0, %s200
    %s222 = sphi 0, %s224
    %s225 = sphi 0, %s222
    %s226 = sphi 0, %s225
    %s242 = sphi 0, %s226
  $region4: #{tpu_custom_call.1} parent=0 // loop_header_branch
    %17 = sbr.rel (%p15) target = $region8
  $region5: #{tpu_custom_call.1} parent=0 // loop_body
    %s19 = ssub.s32 %s14, 1
    %s20 = ssub.s32 %s14, 2
    %s30 = sadd.s32 1, %s23
    %p31 = scmp.ge.s32.totalorder %s30, 1
    %s32 = scalar_select %p31, 0, %s30
    %s33 = sadd.s32 1, %s22
    %s34 = scalar_select %p31, %s33, %s22
    %p35 = scmp.ge.s32.totalorder %s34, 1
    %s36 = scalar_select %p35, 0, %s34
    %s37 = sadd.s32 1, %s21
    %s38 = scalar_select %p35, %s37, %s21
    %p39 = scmp.ge.s32.totalorder %s38, 2
    %s40 = scalar_select %p39, 0, %s38
    %s41 = ssub.s32 %s21, %s40
    %s42 = ssub.s32 %s23, %s32
    %s43 = sor.u32 %s41, %s42
    %s44 = ssub.s32 %s22, %s36
    %s45 = sor.u32 %s43, %s44
    %p46 = scmp.eq.s32.totalorder %s45, 0
    %s48 = sadd.s32 %s47, 1
    %s49 = scalar_select %p46, %s47, %s48
    %p52 = pneg %p46
    %p53 = scmp.eq.s32.totalorder %s14, 1
    %p54 = por %p52, %p53
    %p55 = scmp.ne.s32.totalorder %s47, %s50
    %p56 = scmp.eq.s32.totalorder %s14, 0
    %p57 = por %p55, %p56
    %p58 = scmp.ne.s32.totalorder %s47, %s50
    %p59 = scmp.eq.s32.totalorder %s19, 1
    %p60 = por %p58, %p59
    %p61 = scmp.ne.s32.totalorder %s50, %s51
    %p62 = scmp.eq.s32.totalorder %s19, 0
    %p63 = por %p61, %p62
    %p64 = scmp.ne.s32.totalorder %s50, %s51
    %p65 = scmp.eq.s32.totalorder %s20, 1
    %p66 = por %p64, %p65
    %p68 = scmp.ne.s32.totalorder %s51, %s67
    %p69 = scmp.eq.s32.totalorder %s20, 0
    %p70 = por %p68, %p69
    %s72 = sadd.s32 %s71, 1
    %p75 = scmp.eq.s32.totalorder %s14, 1
    %p76 = scmp.ne.s32.totalorder %s71, %s73
    %p77 = scmp.eq.s32.totalorder %s14, 0
    %p78 = por %p76, %p77
    %p79 = scmp.ne.s32.totalorder %s71, %s73
    %p80 = scmp.eq.s32.totalorder %s19, 1
    %p81 = por %p79, %p80
    %p82 = scmp.ne.s32.totalorder %s73, %s74
    %p83 = scmp.eq.s32.totalorder %s19, 0
    %p84 = por %p82, %p83
    %p85 = scmp.ne.s32.totalorder %s73, %s74
    %p86 = scmp.eq.s32.totalorder %s20, 1
    %p87 = por %p85, %p86
    %p89 = scmp.ne.s32.totalorder %s74, %s88
    %p90 = scmp.eq.s32.totalorder %s20, 0
    %p91 = por %p89, %p90
    %s93 = sadd.s32 %s92, 1
    %p96 = scmp.eq.s32.totalorder %s14, 1
    %p97 = scmp.ne.s32.totalorder %s92, %s94
    %p98 = scmp.eq.s32.totalorder %s14, 0
    %p99 = por %p97, %p98
    %p100 = scmp.ne.s32.totalorder %s92, %s94
    %p101 = scmp.eq.s32.totalorder %s19, 1
    %p102 = por %p100, %p101
    %p103 = scmp.ne.s32.totalorder %s94, %s95
    %p104 = scmp.eq.s32.totalorder %s19, 0
    %p105 = por %p103, %p104
    %p106 = scmp.ne.s32.totalorder %s94, %s95
    %p107 = scmp.eq.s32.totalorder %s20, 1
    %p108 = por %p106, %p107
    %p110 = scmp.ne.s32.totalorder %s95, %s109
    %p111 = scmp.eq.s32.totalorder %s20, 0
    %p112 = por %p110, %p111
    %s114 = sadd.s32 %s113, 1
    %p117 = scmp.eq.s32.totalorder %s14, 1
    %p118 = scmp.ne.s32.totalorder %s113, %s115
    %p119 = scmp.eq.s32.totalorder %s14, 0
    %p120 = por %p118, %p119
    %p121 = scmp.ne.s32.totalorder %s113, %s115
    %p122 = scmp.eq.s32.totalorder %s19, 1
    %p123 = por %p121, %p122
    %p124 = scmp.ne.s32.totalorder %s115, %s116
    %p125 = scmp.eq.s32.totalorder %s19, 0
    %p126 = por %p124, %p125
    %p127 = scmp.ne.s32.totalorder %s115, %s116
    %p128 = scmp.eq.s32.totalorder %s20, 1
    %p129 = por %p127, %p128
    %p131 = scmp.ne.s32.totalorder %s116, %s130
    %p132 = scmp.eq.s32.totalorder %s20, 0
    %p133 = por %p131, %p132
    %s135 = sadd.s32 %s134, 1
    %p138 = scmp.eq.s32.totalorder %s14, 1
    %p139 = scmp.ne.s32.totalorder %s134, %s136
    %p140 = scmp.eq.s32.totalorder %s14, 0
    %p141 = por %p139, %p140
    %p142 = scmp.ne.s32.totalorder %s134, %s136
    %p143 = scmp.eq.s32.totalorder %s19, 1
    %p144 = por %p142, %p143
    %p145 = scmp.ne.s32.totalorder %s136, %s137
    %p146 = scmp.eq.s32.totalorder %s19, 0
    %p147 = por %p145, %p146
    %p148 = scmp.ne.s32.totalorder %s136, %s137
    %p149 = scmp.eq.s32.totalorder %s20, 1
    %p150 = por %p148, %p149
    %p152 = scmp.ne.s32.totalorder %s137, %s151
    %p153 = scmp.eq.s32.totalorder %s20, 0
    %p154 = por %p152, %p153
    %s156 = sadd.s32 %s155, 1
    %p159 = scmp.eq.s32.totalorder %s14, 1
    %p160 = scmp.ne.s32.totalorder %s155, %s157
    %p161 = scmp.eq.s32.totalorder %s14, 0
    %p162 = por %p160, %p161
    %p163 = scmp.ne.s32.totalorder %s155, %s157
    %p164 = scmp.eq.s32.totalorder %s19, 1
    %p165 = por %p163, %p164
    %p166 = scmp.ne.s32.totalorder %s157, %s158
    %p167 = scmp.eq.s32.totalorder %s19, 0
    %p168 = por %p166, %p167
    %p169 = scmp.ne.s32.totalorder %s157, %s158
    %p170 = scmp.eq.s32.totalorder %s20, 1
    %p171 = por %p169, %p170
    %p173 = scmp.ne.s32.totalorder %s158, %s172
    %p174 = scmp.eq.s32.totalorder %s20, 0
    %p175 = por %p173, %p174
    %s177 = sadd.s32 %s176, 1
    %p180 = scmp.eq.s32.totalorder %s14, 1
    %p181 = scmp.ne.s32.totalorder %s176, %s178
    %p182 = scmp.eq.s32.totalorder %s14, 0
    %p183 = por %p181, %p182
    %p184 = scmp.ne.s32.totalorder %s176, %s178
    %p185 = scmp.eq.s32.totalorder %s19, 1
    %p186 = por %p184, %p185
    %p187 = scmp.ne.s32.totalorder %s178, %s179
    %p188 = scmp.eq.s32.totalorder %s19, 0
    %p189 = por %p187, %p188
    %p190 = scmp.ne.s32.totalorder %s178, %s179
    %p191 = scmp.eq.s32.totalorder %s20, 1
    %p192 = por %p190, %p191
    %p194 = scmp.ne.s32.totalorder %s179, %s193
    %p195 = scmp.eq.s32.totalorder %s20, 0
    %p196 = por %p194, %p195
    %s198 = sadd.s32 %s197, 1
    %p201 = scmp.eq.s32.totalorder %s14, 1
    %p202 = scmp.ne.s32.totalorder %s197, %s199
    %p203 = scmp.eq.s32.totalorder %s14, 0
    %p204 = por %p202, %p203
    %p205 = scmp.ne.s32.totalorder %s197, %s199
    %p206 = scmp.eq.s32.totalorder %s19, 1
    %p207 = por %p205, %p206
    %p208 = scmp.ne.s32.totalorder %s199, %s200
    %p209 = scmp.eq.s32.totalorder %s19, 0
    %p210 = por %p208, %p209
    %p211 = scmp.ne.s32.totalorder %s199, %s200
    %p212 = scmp.eq.s32.totalorder %s20, 1
    %p213 = por %p211, %p212
    %p215 = scmp.ne.s32.totalorder %s200, %s214
    %p216 = scmp.eq.s32.totalorder %s20, 0
    %p217 = por %p215, %p216
    %s218 = ssub.s32 %s21, %s40
    %s219 = ssub.s32 %s22, %s36
    %s220 = sor.u32 %s218, %s219
    %p221 = scmp.eq.s32.totalorder %s220, 0
    %s223 = sadd.s32 %s222, 1
    %s224 = scalar_select %p221, %s222, %s223
    %p227 = pneg %p221
    %p228 = scmp.eq.s32.totalorder %s14, 1
    %p229 = por %p227, %p228
    %p230 = scmp.ne.s32.totalorder %s222, %s225
    %p231 = scmp.eq.s32.totalorder %s14, 0
    %p232 = por %p230, %p231
    %p233 = scmp.ne.s32.totalorder %s222, %s225
    %p234 = scmp.eq.s32.totalorder %s19, 1
    %p235 = por %p233, %p234
    %p236 = scmp.ne.s32.totalorder %s225, %s226
    %p237 = scmp.eq.s32.totalorder %s19, 0
    %p238 = por %p236, %p237
    %p239 = scmp.ne.s32.totalorder %s225, %s226
    %p240 = scmp.eq.s32.totalorder %s20, 1
    %p241 = por %p239, %p240
    %p243 = scmp.ne.s32.totalorder %s226, %s242
    %p244 = scmp.eq.s32.totalorder %s20, 0
    %p245 = por %p243, %p244
    %p246 = scmp.le.s32.totalorder 1, %s14
    %p247 = scmp.lt.s32.totalorder %s14, 3
    %p248 = pnand %p246, %p247
    %p249 = pneg %p248
    // Predicated region
    $region9: #{tpu_custom_call.1} parent=5 // pred_check
      _
    $region10: #{tpu_custom_call.1} parent=5 // pred_check_branch
      %251 = sbr.rel (%p248) target = $region12
    $region11: #{tpu_custom_call.1} parent=5 // pred_region
      %s252 = ssub.s32 %s14, 1
      // Predicated region
      $region13: #{tpu_custom_call.1} parent=11 // pred_check
        %p253 = pneg %p84
      $region14: #{tpu_custom_call.1} parent=11 // pred_check_branch
        %255 = sbr.rel (%p253) target = $region16
      $region15: #{tpu_custom_call.1} parent=11 // pred_region
        _
      $region16: #{tpu_custom_call.1} parent=11 // pred_fallthru
        _
      // Predicated region
      $region17: #{tpu_custom_call.1} parent=11 // pred_check
        %p256 = pneg %p105
      $region18: #{tpu_custom_call.1} parent=11 // pred_check_branch
        %258 = sbr.rel (%p256) target = $region20
      $region19: #{tpu_custom_call.1} parent=11 // pred_region
        _
      $region20: #{tpu_custom_call.1} parent=11 // pred_fallthru
        _
      // Predicated region
      $region21: #{tpu_custom_call.1} parent=11 // pred_check
        %p259 = pneg %p126
      $region22: #{tpu_custom_call.1} parent=11 // pred_check_branch
        %261 = sbr.rel (%p259) target = $region24
      $region23: #{tpu_custom_call.1} parent=11 // pred_region
        _
      $region24: #{tpu_custom_call.1} parent=11 // pred_fallthru
        _
      // Predicated region
      $region25: #{tpu_custom_call.1} parent=11 // pred_check
        %p262 = pneg %p147
      $region26: #{tpu_custom_call.1} parent=11 // pred_check_branch
        %264 = sbr.rel (%p262) target = $region28
      $region27: #{tpu_custom_call.1} parent=11 // pred_region
        _
      $region28: #{tpu_custom_call.1} parent=11 // pred_fallthru
        _
      // Predicated region
      $region29: #{tpu_custom_call.1} parent=11 // pred_check
        %p265 = pneg %p168
      $region30: #{tpu_custom_call.1} parent=11 // pred_check_branch
        %267 = sbr.rel (%p265) target = $region32
      $region31: #{tpu_custom_call.1} parent=11 // pred_region
        _
      $region32: #{tpu_custom_call.1} parent=11 // pred_fallthru
        _
      // Predicated region
      $region33: #{tpu_custom_call.1} parent=11 // pred_check
        %p268 = pneg %p189
      $region34: #{tpu_custom_call.1} parent=11 // pred_check_branch
        %270 = sbr.rel (%p268) target = $region36
      $region35: #{tpu_custom_call.1} parent=11 // pred_region
        _
      $region36: #{tpu_custom_call.1} parent=11 // pred_fallthru
        _
      // Predicated region
      $region37: #{tpu_custom_call.1} parent=11 // pred_check
        %p271 = pneg %p210
      $region38: #{tpu_custom_call.1} parent=11 // pred_check_branch
        %273 = sbr.rel (%p271) target = $region40
      $region39: #{tpu_custom_call.1} parent=11 // pred_region
        _
      $region40: #{tpu_custom_call.1} parent=11 // pred_fallthru
        _
    $region12: #{tpu_custom_call.1} parent=5 // pred_fallthru
      _
    %p274 = scmp.lt.s32.totalorder %s14, 2
    // Predicated region
    $region41: #{tpu_custom_call.1} parent=5 // pred_check
      %p275 = pneg %p274
    $region42: #{tpu_custom_call.1} parent=5 // pred_check_branch
      %277 = sbr.rel (%p275) target = $region44
    $region43: #{tpu_custom_call.1} parent=5 // pred_region
      // Predicated region
      $region45: #{tpu_custom_call.1} parent=43 // pred_check
        %p278 = pneg %p57
      $region46: #{tpu_custom_call.1} parent=43 // pred_check_branch
        %280 = sbr.rel (%p278) target = $region48
      $region47: #{tpu_custom_call.1} parent=43 // pred_region
        %s281 = smul.u32 8, %s23
        %p282 = scmp.lt.s32.totalorder %s21, 1
        %s283 = scalar_select %p282, %s21, 1
        %p284 = scmp.lt.s32.totalorder %s281, 7
        %s285 = scalar_select %p284, %s281, 7
        %p286 = scmp.lt.s32.totalorder %s22, 0
        %s287 = scalar_select %p286, %s22, 0
        %s288 = sadd.s32 %s287, %s285
        %s289 = smul.addr %s283, 8
        %s290 = sadd.s32 %s288, %s289
        %s291 = smul.addr %s290, 4
        %s292 = scalar_lea.vmem %s0, %s291
        %s293 = smul.u32 8, %s23
      $region48: #{tpu_custom_call.1} parent=43 // pred_fallthru
        _
    $region44: #{tpu_custom_call.1} parent=5 // pred_fallthru
      _
    %p294 = scmp.le.s32.totalorder 1, %s14
    %p295 = scmp.lt.s32.totalorder %s14, 3
    %p296 = pnand %p294, %p295
    %p297 = pneg %p296
    // Predicated region
    $region49: #{tpu_custom_call.1} parent=5 // pred_check
      _
    $region50: #{tpu_custom_call.1} parent=5 // pred_check_branch
      %299 = sbr.rel (%p296) target = $region52
    $region51: #{tpu_custom_call.1} parent=5 // pred_region
      %s300 = ssub.s32 %s14, 1
      %s301 = smul.u32 8, %s26
      %p302 = scmp.lt.s32.totalorder %s24, 1
      %s303 = scalar_select %p302, %s24, 1
      %p304 = scmp.lt.s32.totalorder %s301, 7
      %s305 = scalar_select %p304, %s301, 7
      %p306 = scmp.lt.s32.totalorder %s25, 0
      %s307 = scalar_select %p306, %s25, 0
      %s308 = sadd.s32 %s307, %s305
      %s309 = smul.addr %s303, 8
      %s310 = sadd.s32 %s308, %s309
      %s311 = smul.addr %s310, 4
      %s312 = scalar_lea.vmem %s0, %s311
      %p313 = pneg %p63
      %p314 = pneg %p60
      %p315 = pneg %p84
      %p316 = pneg %p81
      %p317 = pneg %p105
      %p318 = pneg %p102
      %p319 = pneg %p126
      %p320 = pneg %p123
      %p321 = pneg %p147
      %p322 = pneg %p144
      %p323 = pneg %p168
      %p324 = pneg %p165
      %p325 = pneg %p189
      %p326 = pneg %p186
      %p327 = pneg %p210
      %p328 = pneg %p207
      %p329 = pneg %p238
      %p330 = pneg %p235
      %p331 = scmp.lt.s32.totalorder %s24, 1
      %s332 = scalar_select %p331, %s24, 1
      %p333 = scmp.lt.s32.totalorder %s25, 0
      %s334 = scalar_select %p333, %s25, 0
      %s335 = smul.addr %s332, 4
      %s336 = sadd.s32 %s334, %s335
      %s337 = smul.addr %s336, 8
      %s338 = scalar_lea.vmem %s8, %s337
      %s339 = smul.u32 8, %s26
      %p340 = scmp.lt.s32.totalorder %s24, 1
      %s341 = scalar_select %p340, %s24, 1
      %p342 = scmp.lt.s32.totalorder %s339, 7
      %s343 = scalar_select %p342, %s339, 7
      %p344 = scmp.lt.s32.totalorder %s25, 0
      %s345 = scalar_select %p344, %s25, 0
      %s346 = sadd.s32 %s345, %s343
      %s347 = smul.addr %s341, 8
      %s348 = sadd.s32 %s346, %s347
      %s349 = smul.addr %s348, 4
      %s350 = scalar_lea.vmem %s0, %s349
      %s351 = smul.u32 8, %s26
      %p352 = scmp.lt.s32.totalorder %s24, 1
      %s353 = scalar_select %p352, %s24, 1
      %p354 = scmp.lt.s32.totalorder %s25, 0
      %s355 = scalar_select %p354, %s25, 0
      %s356 = smul.addr %s353, 4
      %s357 = sadd.s32 %s355, %s356
      %s358 = smul.addr %s357, 8
      %s359 = scalar_lea.vmem %s8, %s358
      %v361 = vld [vmem:[%s350] sm:$0xf]
      %v362 = vld [vmem:[%s1] sm:$0xf]
      %v363 = vld [vmem:[%s1 + $0x4] sm:$0xf]
      %v364 = vld [vmem:[%s1 + $0x8] sm:$0xf]
      %v365 = vld [vmem:[%s1 + $0xc] sm:$0xf]
      %v366 = vld [vmem:[%s1 + $0x10] sm:$0xf]
      %v367 = vld [vmem:[%s1 + $0x14] sm:$0xf]
      %v368 = vld [vmem:[%s1 + $0x18] sm:$0xf]
      %v369 = vld [vmem:[%s1 + $0x1c] sm:$0xf]
      %v378 = vunpack.c.l.b16 %v362
      %v379 = vunpack.c.l.b16 %v363
      %v380 = vunpack.c.l.b16 %v364
      %v381 = vunpack.c.l.b16 %v365
      %v382 = vunpack.c.l.b16 %v366
      %v383 = vunpack.c.l.b16 %v367
      %v384 = vunpack.c.l.b16 %v368
      %v385 = vunpack.c.l.b16 %v369
      %v386 = vpack.c.b16 %v379, %v378
      %v387 = vpack.c.b16 %v381, %v380
      %v388 = vpack.c.b16 %v383, %v382
      %v389 = vpack.c.b16 %v385, %v384
      %vm390 = vcmask 64512
      %v392 = vsel %vm390, %v386, 0
      %v395 = vsel %vm390, %v387, 0
      %v398 = vsel %vm390, %v388, 0
      %v401 = vsel %vm390, %v389, 0
      %vm403 = vcmask 1043456
      %v405 = vsel %vm403, %v361, 0
      %407 = vmatpush.bf16.msra.mxu0 0
      %408 = vmatpush.bf16.msra.mxu0 0
      %409 = vmatpush.bf16.msra.mxu0 0
      %410 = vmatpush.bf16.msra.mxu0 0
      %411 = vmatpush.bf16.msra.mxu0 0
      %412 = vmatpush.bf16.msra.mxu0 0
      %413 = vmatpush.bf16.msra.mxu0 0
      %414 = vmatpush.bf16.msra.mxu0 %v405
      %415 = vmatmul.bf16.gmra.mxu0 %v392
      %v416 = vpop.f32.mrf.mxu0
      %v417 = vadd.f32 0.0, %v416
      %v418 = vpop.f32.mrf.mxu0
      %v419 = vadd.f32 0.0, %v418
      %420 = vmatmul.bf16.gmra.mxu0 %v395
      %v421 = vpop.f32.mrf.mxu0
      %v422 = vadd.f32 0.0, %v421
      %v423 = vpop.f32.mrf.mxu0
      %v424 = vadd.f32 0.0, %v423
      %425 = vmatmul.bf16.gmra.mxu0 %v398
      %v426 = vpop.f32.mrf.mxu0
      %v427 = vadd.f32 0.0, %v426
      %v428 = vpop.f32.mrf.mxu0
      %v429 = vadd.f32 0.0, %v428
      %430 = vmatmul.bf16.gmra.mxu0 %v401
      %v431 = vpop.f32.mrf.mxu0
      %v432 = vadd.f32 0.0, %v431
      %v433 = vpop.f32.mrf.mxu0
      %v434 = vadd.f32 0.0, %v433
      %435 = vdwg.mxu0
      %v436 = vmul.f32 %v417, 0.2
      %v437 = vmul.f32 %v419, 0.2
      %v438 = vmul.f32 %v422, 0.2
      %v439 = vmul.f32 %v424, 0.2
      %v440 = vmul.f32 %v427, 0.2
      %v441 = vmul.f32 %v429, 0.2
      %v442 = vmul.f32 %v432, 0.2
      %v443 = vmul.f32 %v434, 0.2
      %v444 = vmax.f32 %v417, %v436
      %v445 = vmax.f32 %v419, %v437
      %v446 = vmax.f32 %v422, %v438
      %v447 = vmax.f32 %v424, %v439
      %v448 = vmax.f32 %v427, %v440
      %v449 = vmax.f32 %v429, %v441
      %v450 = vmax.f32 %v432, %v442
      %v451 = vmax.f32 %v434, %v443
      %v452 = vld [vmem:[%s2] sm:$0xf]
      %v453 = vld [vmem:[%s2 + $0x4] sm:$0xf]
      %v454 = vld [vmem:[%s2 + $0x8] sm:$0xf]
      %v455 = vld [vmem:[%s2 + $0xc] sm:$0xf]
      %v456 = vld [vmem:[%s2 + $0x10] sm:$0xf]
      %v457 = vld [vmem:[%s2 + $0x14] sm:$0xf]
      %v458 = vld [vmem:[%s2 + $0x18] sm:$0xf]
      %v459 = vld [vmem:[%s2 + $0x1c] sm:$0xf]
      %v460 = vpack.c.bf16 %v445, %v444
      %v461 = vpack.c.bf16 %v447, %v446
      %v462 = vpack.c.bf16 %v449, %v448
      %v463 = vpack.c.bf16 %v451, %v450
      %v464 = vld [vmem:[%s4] sm:$0xff]
      %v465 = vld [vmem:[%s4 + $0x8] sm:$0xff]
      %v466 = vld [vmem:[%s4 + $0x10] sm:$0xff]
      %v467 = vld [vmem:[%s4 + $0x18] sm:$0xff]
      %v468 = vld [vmem:[%s4 + $0x20] sm:$0xff]
      %v469 = vld [vmem:[%s4 + $0x28] sm:$0xff]
      %v470 = vld [vmem:[%s4 + $0x30] sm:$0xff]
      %v471 = vld [vmem:[%s4 + $0x38] sm:$0xff]
      %473 = vset.pattern.permute.xlu0 0
      %474 = vperm.xlu0 %473, %v464
      %v475 = vpop.permute.xlu0 %474
      %478 = vset.pattern.permute.xlu0 0
      %479 = vperm.xlu0 %478, %v465
      %v480 = vpop.permute.xlu0 %479
      %483 = vset.pattern.permute.xlu0 0
      %484 = vperm.xlu0 %483, %v466
      %v485 = vpop.permute.xlu0 %484
      %488 = vset.pattern.permute.xlu0 0
      %489 = vperm.xlu0 %488, %v467
      %v490 = vpop.permute.xlu0 %489
      %493 = vset.pattern.permute.xlu0 0
      %494 = vperm.xlu0 %493, %v468
      %v495 = vpop.permute.xlu0 %494
      %498 = vset.pattern.permute.xlu0 0
      %499 = vperm.xlu0 %498, %v469
      %v500 = vpop.permute.xlu0 %499
      %503 = vset.pattern.permute.xlu0 0
      %504 = vperm.xlu0 %503, %v470
      %v505 = vpop.permute.xlu0 %504
      %508 = vset.pattern.permute.xlu0 0
      %509 = vperm.xlu0 %508, %v471
      %v510 = vpop.permute.xlu0 %509
      %v520 = vunpack.c.l.b16 %v452
      %v521 = vunpack.c.l.b16 %v453
      %v522 = vunpack.c.l.b16 %v454
      %v523 = vunpack.c.l.b16 %v455
      %v524 = vunpack.c.l.b16 %v456
      %v525 = vunpack.c.l.b16 %v457
      %v526 = vunpack.c.l.b16 %v458
      %v527 = vunpack.c.l.b16 %v459
      %v528 = vpack.c.b16 %v521, %v520
      %v529 = vpack.c.b16 %v523, %v522
      %v530 = vpack.c.b16 %v525, %v524
      %v531 = vpack.c.b16 %v527, %v526
      %vm532 = vcmask 523264
      %v534 = vsel %vm532, %v528, 0
      %v537 = vsel %vm532, %v529, 0
      %v540 = vsel %vm532, %v530, 0
      %v543 = vsel %vm532, %v531, 0
      %545 = vmatpush.bf16.msra.mxu0 0
      %546 = vmatpush.bf16.msra.mxu0 0
      %547 = vmatpush.bf16.msra.mxu0 0
      %548 = vmatpush.bf16.msra.mxu0 0
      %549 = vmatpush.bf16.msra.mxu0 %v463
      %550 = vmatpush.bf16.msra.mxu0 %v462
      %551 = vmatpush.bf16.msra.mxu0 %v461
      %552 = vmatpush.bf16.msra.mxu0 %v460
      %553 = vmatmul.bf16.gmra.mxu0 %v534
      %v554 = vpop.f32.mrf.mxu0
      %v555 = vadd.f32 %v475, %v554
      %v556 = vpop.f32.mrf.mxu0
      %v557 = vadd.f32 %v480, %v556
      %558 = vmatmul.bf16.gmra.mxu0 %v537
      %v559 = vpop.f32.mrf.mxu0
      %v560 = vadd.f32 %v485, %v559
      %v561 = vpop.f32.mrf.mxu0
      %v562 = vadd.f32 %v490, %v561
      %563 = vmatmul.bf16.gmra.mxu0 %v540
      %v564 = vpop.f32.mrf.mxu0
      %v565 = vadd.f32 %v495, %v564
      %v566 = vpop.f32.mrf.mxu0
      %v567 = vadd.f32 %v500, %v566
      %568 = vmatmul.bf16.gmra.mxu0 %v543
      %v569 = vpop.f32.mrf.mxu0
      %v570 = vadd.f32 %v505, %v569
      %v571 = vpop.f32.mrf.mxu0
      %v572 = vadd.f32 %v510, %v571
      %573 = vdwg.mxu0
      %v574 = vmul.f32 %v555, 0.2
      %v575 = vmul.f32 %v557, 0.2
      %v576 = vmul.f32 %v560, 0.2
      %v577 = vmul.f32 %v562, 0.2
      %v578 = vmul.f32 %v565, 0.2
      %v579 = vmul.f32 %v567, 0.2
      %v580 = vmul.f32 %v570, 0.2
      %v581 = vmul.f32 %v572, 0.2
      %v582 = vmax.f32 %v555, %v574
      %v583 = vmax.f32 %v557, %v575
      %v584 = vmax.f32 %v560, %v576
      %v585 = vmax.f32 %v562, %v577
      %v586 = vmax.f32 %v565, %v578
      %v587 = vmax.f32 %v567, %v579
      %v588 = vmax.f32 %v570, %v580
      %v589 = vmax.f32 %v572, %v581
      %v590 = vld [vmem:[%s3] sm:$0xf]
      %v591 = vld [vmem:[%s3 + $0x4] sm:$0xf]
      %v592 = vld [vmem:[%s3 + $0x8] sm:$0xf]
      %v593 = vld [vmem:[%s3 + $0xc] sm:$0xf]
      %v594 = vpack.c.bf16 %v583, %v582
      %v595 = vpack.c.bf16 %v585, %v584
      %v596 = vpack.c.bf16 %v587, %v586
      %v597 = vpack.c.bf16 %v589, %v588
      %v598 = vld [vmem:[%s5] sm:$0xff]
      %v599 = vld [vmem:[%s5 + $0x8] sm:$0xff]
      %v600 = vld [vmem:[%s5 + $0x10] sm:$0xff]
      %v601 = vld [vmem:[%s5 + $0x18] sm:$0xff]
      %603 = vset.pattern.permute.xlu0 0
      %604 = vperm.xlu0 %603, %v598
      %v605 = vpop.permute.xlu0 %604
      %608 = vset.pattern.permute.xlu0 0
      %609 = vperm.xlu0 %608, %v599
      %v610 = vpop.permute.xlu0 %609
      %613 = vset.pattern.permute.xlu0 0
      %614 = vperm.xlu0 %613, %v600
      %v615 = vpop.permute.xlu0 %614
      %618 = vset.pattern.permute.xlu0 0
      %619 = vperm.xlu0 %618, %v601
      %v620 = vpop.permute.xlu0 %619
      %v626 = vunpack.c.l.b16 %v590
      %v627 = vunpack.c.l.b16 %v591
      %v628 = vunpack.c.l.b16 %v592
      %v629 = vunpack.c.l.b16 %v593
      %v630 = vpack.c.b16 %v627, %v626
      %v631 = vpack.c.b16 %v629, %v628
      %v633 = vsel %vm532, %v630, 0
      %v636 = vsel %vm532, %v631, 0
      %638 = vmatpush.bf16.msra.mxu0 0
      %639 = vmatpush.bf16.msra.mxu0 0
      %640 = vmatpush.bf16.msra.mxu0 0
      %641 = vmatpush.bf16.msra.mxu0 0
      %642 = vmatpush.bf16.msra.mxu0 %v597
      %643 = vmatpush.bf16.msra.mxu0 %v596
      %644 = vmatpush.bf16.msra.mxu0 %v595
      %645 = vmatpush.bf16.msra.mxu0 %v594
      %646 = vmatmul.bf16.gmra.mxu0 %v633
      %v647 = vpop.f32.mrf.mxu0
      %v648 = vadd.f32 %v605, %v647
      %v649 = vpop.f32.mrf.mxu0
      %v650 = vadd.f32 %v610, %v649
      %651 = vmatmul.bf16.gmra.mxu0 %v636
      %v652 = vpop.f32.mrf.mxu0
      %v653 = vadd.f32 %v615, %v652
      %v654 = vpop.f32.mrf.mxu0
      %v655 = vadd.f32 %v620, %v654
      %656 = vdwg.mxu0
      %v657 = vmul.f32 %v648, 0.2
      %v658 = vmul.f32 %v650, 0.2
      %v659 = vmul.f32 %v653, 0.2
      %v660 = vmul.f32 %v655, 0.2
      %v661 = vmax.f32 %v648, %v657
      %v662 = vmax.f32 %v650, %v658
      %v663 = vmax.f32 %v653, %v659
      %v664 = vmax.f32 %v655, %v660
      %v665 = vld [vmem:[%s6] sm:$0xff]
      %v666 = vld [vmem:[%s6 + $0x8] sm:$0xff]
      %v667 = vld [vmem:[%s6 + $0x10] sm:$0xff]
      %v668 = vld [vmem:[%s6 + $0x18] sm:$0xff]
      %670 = vset.pattern.permute.xlu0 0
      %671 = vperm.xlu0 %670, %v665
      %v672 = vpop.permute.xlu0 %671
      %675 = vset.pattern.permute.xlu0 0
      %676 = vperm.xlu0 %675, %v666
      %v677 = vpop.permute.xlu0 %676
      %680 = vset.pattern.permute.xlu0 0
      %681 = vperm.xlu0 %680, %v667
      %v682 = vpop.permute.xlu0 %681
      %685 = vset.pattern.permute.xlu0 0
      %686 = vperm.xlu0 %685, %v668
      %v687 = vpop.permute.xlu0 %686
      %v689 = vmul.f32 %v661, %v672
      %v690 = vmul.f32 %v662, %v677
      %v691 = vmul.f32 %v663, %v682
      %v692 = vmul.f32 %v664, %v687
      %v693 = vld [vmem:[%s7] sm:$0xff]
      %v694 = vld [vmem:[%s7 + $0x8] sm:$0xff]
      %v695 = vld [vmem:[%s7 + $0x10] sm:$0xff]
      %v696 = vld [vmem:[%s7 + $0x18] sm:$0xff]
      %698 = vset.pattern.permute.xlu0 0
      %699 = vperm.xlu0 %698, %v693
      %v700 = vpop.permute.xlu0 %699
      %703 = vset.pattern.permute.xlu0 0
      %704 = vperm.xlu0 %703, %v694
      %v705 = vpop.permute.xlu0 %704
      %708 = vset.pattern.permute.xlu0 0
      %709 = vperm.xlu0 %708, %v695
      %v710 = vpop.permute.xlu0 %709
      %713 = vset.pattern.permute.xlu0 0
      %714 = vperm.xlu0 %713, %v696
      %v715 = vpop.permute.xlu0 %714
      %v717 = vadd.f32 %v689, %v700
      %v718 = vadd.f32 %v690, %v705
      %v719 = vadd.f32 %v691, %v710
      %v720 = vadd.f32 %v692, %v715
      %s721 = scalar_lea.vmem %s350, 4
      %v722 = vld [vmem:[%s721] sm:$0xf]
      %v724 = vsel %vm403, %v722, 0
      %726 = vmatpush.bf16.msra.mxu0 0
      %727 = vmatpush.bf16.msra.mxu0 0
      %728 = vmatpush.bf16.msra.mxu0 0
      %729 = vmatpush.bf16.msra.mxu0 0
      %730 = vmatpush.bf16.msra.mxu0 0
      %731 = vmatpush.bf16.msra.mxu0 0
      %732 = vmatpush.bf16.msra.mxu0 0
      %733 = vmatpush.bf16.msra.mxu0 %v724
      %734 = vmatmul.bf16.gmra.mxu0 %v392
      %v735 = vpop.f32.mrf.mxu0
      %v736 = vadd.f32 0.0, %v735
      %v737 = vpop.f32.mrf.mxu0
      %v738 = vadd.f32 0.0, %v737
      %739 = vmatmul.bf16.gmra.mxu0 %v395
      %v740 = vpop.f32.mrf.mxu0
      %v741 = vadd.f32 0.0, %v740
      %v742 = vpop.f32.mrf.mxu0
      %v743 = vadd.f32 0.0, %v742
      %744 = vmatmul.bf16.gmra.mxu0 %v398
      %v745 = vpop.f32.mrf.mxu0
      %v746 = vadd.f32 0.0, %v745
      %v747 = vpop.f32.mrf.mxu0
      %v748 = vadd.f32 0.0, %v747
      %749 = vmatmul.bf16.gmra.mxu0 %v401
      %v750 = vpop.f32.mrf.mxu0
      %v751 = vadd.f32 0.0, %v750
      %v752 = vpop.f32.mrf.mxu0
      %v753 = vadd.f32 0.0, %v752
      %754 = vdwg.mxu0
      %v755 = vmul.f32 %v736, 0.2
      %v756 = vmul.f32 %v738, 0.2
      %v757 = vmul.f32 %v741, 0.2
      %v758 = vmul.f32 %v743, 0.2
      %v759 = vmul.f32 %v746, 0.2
      %v760 = vmul.f32 %v748, 0.2
      %v761 = vmul.f32 %v751, 0.2
      %v762 = vmul.f32 %v753, 0.2
      %v763 = vmax.f32 %v736, %v755
      %v764 = vmax.f32 %v738, %v756
      %v765 = vmax.f32 %v741, %v757
      %v766 = vmax.f32 %v743, %v758
      %v767 = vmax.f32 %v746, %v759
      %v768 = vmax.f32 %v748, %v760
      %v769 = vmax.f32 %v751, %v761
      %v770 = vmax.f32 %v753, %v762
      %v771 = vpack.c.bf16 %v764, %v763
      %v772 = vpack.c.bf16 %v766, %v765
      %v773 = vpack.c.bf16 %v768, %v767
      %v774 = vpack.c.bf16 %v770, %v769
      %775 = vmatpush.bf16.msra.mxu0 0
      %776 = vmatpush.bf16.msra.mxu0 0
      %777 = vmatpush.bf16.msra.mxu0 0
      %778 = vmatpush.bf16.msra.mxu0 0
      %779 = vmatpush.bf16.msra.mxu0 %v774
      %780 = vmatpush.bf16.msra.mxu0 %v773
      %781 = vmatpush.bf16.msra.mxu0 %v772
      %782 = vmatpush.bf16.msra.mxu0 %v771
      %783 = vmatmul.bf16.gmra.mxu0 %v534
      %v784 = vpop.f32.mrf.mxu0
      %v785 = vadd.f32 %v475, %v784
      %v786 = vpop.f32.mrf.mxu0
      %v787 = vadd.f32 %v480, %v786
      %788 = vmatmul.bf16.gmra.mxu0 %v537
      %v789 = vpop.f32.mrf.mxu0
      %v790 = vadd.f32 %v485, %v789
      %v791 = vpop.f32.mrf.mxu0
      %v792 = vadd.f32 %v490, %v791
      %793 = vmatmul.bf16.gmra.mxu0 %v540
      %v794 = vpop.f32.mrf.mxu0
      %v795 = vadd.f32 %v495, %v794
      %v796 = vpop.f32.mrf.mxu0
      %v797 = vadd.f32 %v500, %v796
      %798 = vmatmul.bf16.gmra.mxu0 %v543
      %v799 = vpop.f32.mrf.mxu0
      %v800 = vadd.f32 %v505, %v799
      %v801 = vpop.f32.mrf.mxu0
      %v802 = vadd.f32 %v510, %v801
      %803 = vdwg.mxu0
      %v804 = vmul.f32 %v785, 0.2
      %v805 = vmul.f32 %v787, 0.2
      %v806 = vmul.f32 %v790, 0.2
      %v807 = vmul.f32 %v792, 0.2
      %v808 = vmul.f32 %v795, 0.2
      %v809 = vmul.f32 %v797, 0.2
      %v810 = vmul.f32 %v800, 0.2
      %v811 = vmul.f32 %v802, 0.2
      %v812 = vmax.f32 %v785, %v804
      %v813 = vmax.f32 %v787, %v805
      %v814 = vmax.f32 %v790, %v806
      %v815 = vmax.f32 %v792, %v807
      %v816 = vmax.f32 %v795, %v808
      %v817 = vmax.f32 %v797, %v809
      %v818 = vmax.f32 %v800, %v810
      %v819 = vmax.f32 %v802, %v811
      %v820 = vpack.c.bf16 %v813, %v812
      %v821 = vpack.c.bf16 %v815, %v814
      %v822 = vpack.c.bf16 %v817, %v816
      %v823 = vpack.c.bf16 %v819, %v818
      %824 = vmatpush.bf16.msra.mxu0 0
      %825 = vmatpush.bf16.msra.mxu0 0
      %826 = vmatpush.bf16.msra.mxu0 0
      %827 = vmatpush.bf16.msra.mxu0 0
      %828 = vmatpush.bf16.msra.mxu0 %v823
      %829 = vmatpush.bf16.msra.mxu0 %v822
      %830 = vmatpush.bf16.msra.mxu0 %v821
      %831 = vmatpush.bf16.msra.mxu0 %v820
      %832 = vmatmul.bf16.gmra.mxu0 %v633
      %v833 = vpop.f32.mrf.mxu0
      %v834 = vadd.f32 %v605, %v833
      %v835 = vpop.f32.mrf.mxu0
      %v836 = vadd.f32 %v610, %v835
      %837 = vmatmul.bf16.gmra.mxu0 %v636
      %v838 = vpop.f32.mrf.mxu0
      %v839 = vadd.f32 %v615, %v838
      %v840 = vpop.f32.mrf.mxu0
      %v841 = vadd.f32 %v620, %v840
      %842 = vdwg.mxu0
      %v843 = vmul.f32 %v834, 0.2
      %v844 = vmul.f32 %v836, 0.2
      %v845 = vmul.f32 %v839, 0.2
      %v846 = vmul.f32 %v841, 0.2
      %v847 = vmax.f32 %v834, %v843
      %v848 = vmax.f32 %v836, %v844
      %v849 = vmax.f32 %v839, %v845
      %v850 = vmax.f32 %v841, %v846
      %v851 = vmul.f32 %v847, %v672
      %v852 = vmul.f32 %v848, %v677
      %v853 = vmul.f32 %v849, %v682
      %v854 = vmul.f32 %v850, %v687
      %v855 = vadd.f32 %v851, %v700
      %v856 = vadd.f32 %v852, %v705
      %v857 = vadd.f32 %v853, %v710
      %v858 = vadd.f32 %v854, %v715
      %v859 = vmax.f32 %v717, %v855
      %v860 = vmax.f32 %v718, %v856
      %v861 = vmax.f32 %v719, %v857
      %v862 = vmax.f32 %v720, %v858
      %s863 = scalar_lea.vmem %s350, 8
      %v864 = vld [vmem:[%s863] sm:$0xf]
      %v866 = vsel %vm403, %v864, 0
      %868 = vmatpush.bf16.msra.mxu0 0
      %869 = vmatpush.bf16.msra.mxu0 0
      %870 = vmatpush.bf16.msra.mxu0 0
      %871 = vmatpush.bf16.msra.mxu0 0
      %872 = vmatpush.bf16.msra.mxu0 0
      %873 = vmatpush.bf16.msra.mxu0 0
      %874 = vmatpush.bf16.msra.mxu0 0
      %875 = vmatpush.bf16.msra.mxu0 %v866
      %876 = vmatmul.bf16.gmra.mxu0 %v392
      %v877 = vpop.f32.mrf.mxu0
      %v878 = vadd.f32 0.0, %v877
      %v879 = vpop.f32.mrf.mxu0
      %v880 = vadd.f32 0.0, %v879
      %881 = vmatmul.bf16.gmra.mxu0 %v395
      %v882 = vpop.f32.mrf.mxu0
      %v883 = vadd.f32 0.0, %v882
      %v884 = vpop.f32.mrf.mxu0
      %v885 = vadd.f32 0.0, %v884
      %886 = vmatmul.bf16.gmra.mxu0 %v398
      %v887 = vpop.f32.mrf.mxu0
      %v888 = vadd.f32 0.0, %v887
      %v889 = vpop.f32.mrf.mxu0
      %v890 = vadd.f32 0.0, %v889
      %891 = vmatmul.bf16.gmra.mxu0 %v401
      %v892 = vpop.f32.mrf.mxu0
      %v893 = vadd.f32 0.0, %v892
      %v894 = vpop.f32.mrf.mxu0
      %v895 = vadd.f32 0.0, %v894
      %896 = vdwg.mxu0
      %v897 = vmul.f32 %v878, 0.2
      %v898 = vmul.f32 %v880, 0.2
      %v899 = vmul.f32 %v883, 0.2
      %v900 = vmul.f32 %v885, 0.2
      %v901 = vmul.f32 %v888, 0.2
      %v902 = vmul.f32 %v890, 0.2
      %v903 = vmul.f32 %v893, 0.2
      %v904 = vmul.f32 %v895, 0.2
      %v905 = vmax.f32 %v878, %v897
      %v906 = vmax.f32 %v880, %v898
      %v907 = vmax.f32 %v883, %v899
      %v908 = vmax.f32 %v885, %v900
      %v909 = vmax.f32 %v888, %v901
      %v910 = vmax.f32 %v890, %v902
      %v911 = vmax.f32 %v893, %v903
      %v912 = vmax.f32 %v895, %v904
      %v913 = vpack.c.bf16 %v906, %v905
      %v914 = vpack.c.bf16 %v908, %v907
      %v915 = vpack.c.bf16 %v910, %v909
      %v916 = vpack.c.bf16 %v912, %v911
      %917 = vmatpush.bf16.msra.mxu0 0
      %918 = vmatpush.bf16.msra.mxu0 0
      %919 = vmatpush.bf16.msra.mxu0 0
      %920 = vmatpush.bf16.msra.mxu0 0
      %921 = vmatpush.bf16.msra.mxu0 %v916
      %922 = vmatpush.bf16.msra.mxu0 %v915
      %923 = vmatpush.bf16.msra.mxu0 %v914
      %924 = vmatpush.bf16.msra.mxu0 %v913
      %925 = vmatmul.bf16.gmra.mxu0 %v534
      %v926 = vpop.f32.mrf.mxu0
      %v927 = vadd.f32 %v475, %v926
      %v928 = vpop.f32.mrf.mxu0
      %v929 = vadd.f32 %v480, %v928
      %930 = vmatmul.bf16.gmra.mxu0 %v537
      %v931 = vpop.f32.mrf.mxu0
      %v932 = vadd.f32 %v485, %v931
      %v933 = vpop.f32.mrf.mxu0
      %v934 = vadd.f32 %v490, %v933
      %935 = vmatmul.bf16.gmra.mxu0 %v540
      %v936 = vpop.f32.mrf.mxu0
      %v937 = vadd.f32 %v495, %v936
      %v938 = vpop.f32.mrf.mxu0
      %v939 = vadd.f32 %v500, %v938
      %940 = vmatmul.bf16.gmra.mxu0 %v543
      %v941 = vpop.f32.mrf.mxu0
      %v942 = vadd.f32 %v505, %v941
      %v943 = vpop.f32.mrf.mxu0
      %v944 = vadd.f32 %v510, %v943
      %945 = vdwg.mxu0
      %v946 = vmul.f32 %v927, 0.2
      %v947 = vmul.f32 %v929, 0.2
      %v948 = vmul.f32 %v932, 0.2
      %v949 = vmul.f32 %v934, 0.2
      %v950 = vmul.f32 %v937, 0.2
      %v951 = vmul.f32 %v939, 0.2
      %v952 = vmul.f32 %v942, 0.2
      %v953 = vmul.f32 %v944, 0.2
      %v954 = vmax.f32 %v927, %v946
      %v955 = vmax.f32 %v929, %v947
      %v956 = vmax.f32 %v932, %v948
      %v957 = vmax.f32 %v934, %v949
      %v958 = vmax.f32 %v937, %v950
      %v959 = vmax.f32 %v939, %v951
      %v960 = vmax.f32 %v942, %v952
      %v961 = vmax.f32 %v944, %v953
      %v962 = vpack.c.bf16 %v955, %v954
      %v963 = vpack.c.bf16 %v957, %v956
      %v964 = vpack.c.bf16 %v959, %v958
      %v965 = vpack.c.bf16 %v961, %v960
      %966 = vmatpush.bf16.msra.mxu0 0
      %967 = vmatpush.bf16.msra.mxu0 0
      %968 = vmatpush.bf16.msra.mxu0 0
      %969 = vmatpush.bf16.msra.mxu0 0
      %970 = vmatpush.bf16.msra.mxu0 %v965
      %971 = vmatpush.bf16.msra.mxu0 %v964
      %972 = vmatpush.bf16.msra.mxu0 %v963
      %973 = vmatpush.bf16.msra.mxu0 %v962
      %974 = vmatmul.bf16.gmra.mxu0 %v633
      %v975 = vpop.f32.mrf.mxu0
      %v976 = vadd.f32 %v605, %v975
      %v977 = vpop.f32.mrf.mxu0
      %v978 = vadd.f32 %v610, %v977
      %979 = vmatmul.bf16.gmra.mxu0 %v636
      %v980 = vpop.f32.mrf.mxu0
      %v981 = vadd.f32 %v615, %v980
      %v982 = vpop.f32.mrf.mxu0
      %v983 = vadd.f32 %v620, %v982
      %984 = vdwg.mxu0
      %v985 = vmul.f32 %v976, 0.2
      %v986 = vmul.f32 %v978, 0.2
      %v987 = vmul.f32 %v981, 0.2
      %v988 = vmul.f32 %v983, 0.2
      %v989 = vmax.f32 %v976, %v985
      %v990 = vmax.f32 %v978, %v986
      %v991 = vmax.f32 %v981, %v987
      %v992 = vmax.f32 %v983, %v988
      %v993 = vmul.f32 %v989, %v672
      %v994 = vmul.f32 %v990, %v677
      %v995 = vmul.f32 %v991, %v682
      %v996 = vmul.f32 %v992, %v687
      %v997 = vadd.f32 %v993, %v700
      %v998 = vadd.f32 %v994, %v705
      %v999 = vadd.f32 %v995, %v710
      %v1000 = vadd.f32 %v996, %v715
      %v1001 = vmax.f32 %v859, %v997
      %v1002 = vmax.f32 %v860, %v998
      %v1003 = vmax.f32 %v861, %v999
      %v1004 = vmax.f32 %v862, %v1000
      %s1005 = scalar_lea.vmem %s350, 12
      %v1006 = vld [vmem:[%s1005] sm:$0xf]
      %v1008 = vsel %vm403, %v1006, 0
      %1010 = vmatpush.bf16.msra.mxu0 0
      %1011 = vmatpush.bf16.msra.mxu0 0
      %1012 = vmatpush.bf16.msra.mxu0 0
      %1013 = vmatpush.bf16.msra.mxu0 0
      %1014 = vmatpush.bf16.msra.mxu0 0
      %1015 = vmatpush.bf16.msra.mxu0 0
      %1016 = vmatpush.bf16.msra.mxu0 0
      %1017 = vmatpush.bf16.msra.mxu0 %v1008
      %1018 = vmatmul.bf16.gmra.mxu0 %v392
      %v1019 = vpop.f32.mrf.mxu0
      %v1020 = vadd.f32 0.0, %v1019
      %v1021 = vpop.f32.mrf.mxu0
      %v1022 = vadd.f32 0.0, %v1021
      %1023 = vmatmul.bf16.gmra.mxu0 %v395
      %v1024 = vpop.f32.mrf.mxu0
      %v1025 = vadd.f32 0.0, %v1024
      %v1026 = vpop.f32.mrf.mxu0
      %v1027 = vadd.f32 0.0, %v1026
      %1028 = vmatmul.bf16.gmra.mxu0 %v398
      %v1029 = vpop.f32.mrf.mxu0
      %v1030 = vadd.f32 0.0, %v1029
      %v1031 = vpop.f32.mrf.mxu0
      %v1032 = vadd.f32 0.0, %v1031
      %1033 = vmatmul.bf16.gmra.mxu0 %v401
      %v1034 = vpop.f32.mrf.mxu0
      %v1035 = vadd.f32 0.0, %v1034
      %v1036 = vpop.f32.mrf.mxu0
      %v1037 = vadd.f32 0.0, %v1036
      %1038 = vdwg.mxu0
      %v1039 = vmul.f32 %v1020, 0.2
      %v1040 = vmul.f32 %v1022, 0.2
      %v1041 = vmul.f32 %v1025, 0.2
      %v1042 = vmul.f32 %v1027, 0.2
      %v1043 = vmul.f32 %v1030, 0.2
      %v1044 = vmul.f32 %v1032, 0.2
      %v1045 = vmul.f32 %v1035, 0.2
      %v1046 = vmul.f32 %v1037, 0.2
      %v1047 = vmax.f32 %v1020, %v1039
      %v1048 = vmax.f32 %v1022, %v1040
      %v1049 = vmax.f32 %v1025, %v1041
      %v1050 = vmax.f32 %v1027, %v1042
      %v1051 = vmax.f32 %v1030, %v1043
      %v1052 = vmax.f32 %v1032, %v1044
      %v1053 = vmax.f32 %v1035, %v1045
      %v1054 = vmax.f32 %v1037, %v1046
      %v1055 = vpack.c.bf16 %v1048, %v1047
      %v1056 = vpack.c.bf16 %v1050, %v1049
      %v1057 = vpack.c.bf16 %v1052, %v1051
      %v1058 = vpack.c.bf16 %v1054, %v1053
      %1059 = vmatpush.bf16.msra.mxu0 0
      %1060 = vmatpush.bf16.msra.mxu0 0
      %1061 = vmatpush.bf16.msra.mxu0 0
      %1062 = vmatpush.bf16.msra.mxu0 0
      %1063 = vmatpush.bf16.msra.mxu0 %v1058
      %1064 = vmatpush.bf16.msra.mxu0 %v1057
      %1065 = vmatpush.bf16.msra.mxu0 %v1056
      %1066 = vmatpush.bf16.msra.mxu0 %v1055
      %1067 = vmatmul.bf16.gmra.mxu0 %v534
      %v1068 = vpop.f32.mrf.mxu0
      %v1069 = vadd.f32 %v475, %v1068
      %v1070 = vpop.f32.mrf.mxu0
      %v1071 = vadd.f32 %v480, %v1070
      %1072 = vmatmul.bf16.gmra.mxu0 %v537
      %v1073 = vpop.f32.mrf.mxu0
      %v1074 = vadd.f32 %v485, %v1073
      %v1075 = vpop.f32.mrf.mxu0
      %v1076 = vadd.f32 %v490, %v1075
      %1077 = vmatmul.bf16.gmra.mxu0 %v540
      %v1078 = vpop.f32.mrf.mxu0
      %v1079 = vadd.f32 %v495, %v1078
      %v1080 = vpop.f32.mrf.mxu0
      %v1081 = vadd.f32 %v500, %v1080
      %1082 = vmatmul.bf16.gmra.mxu0 %v543
      %v1083 = vpop.f32.mrf.mxu0
      %v1084 = vadd.f32 %v505, %v1083
      %v1085 = vpop.f32.mrf.mxu0
      %v1086 = vadd.f32 %v510, %v1085
      %1087 = vdwg.mxu0
      %v1088 = vmul.f32 %v1069, 0.2
      %v1089 = vmul.f32 %v1071, 0.2
      %v1090 = vmul.f32 %v1074, 0.2
      %v1091 = vmul.f32 %v1076, 0.2
      %v1092 = vmul.f32 %v1079, 0.2
      %v1093 = vmul.f32 %v1081, 0.2
      %v1094 = vmul.f32 %v1084, 0.2
      %v1095 = vmul.f32 %v1086, 0.2
      %v1096 = vmax.f32 %v1069, %v1088
      %v1097 = vmax.f32 %v1071, %v1089
      %v1098 = vmax.f32 %v1074, %v1090
      %v1099 = vmax.f32 %v1076, %v1091
      %v1100 = vmax.f32 %v1079, %v1092
      %v1101 = vmax.f32 %v1081, %v1093
      %v1102 = vmax.f32 %v1084, %v1094
      %v1103 = vmax.f32 %v1086, %v1095
      %v1104 = vpack.c.bf16 %v1097, %v1096
      %v1105 = vpack.c.bf16 %v1099, %v1098
      %v1106 = vpack.c.bf16 %v1101, %v1100
      %v1107 = vpack.c.bf16 %v1103, %v1102
      %1108 = vmatpush.bf16.msra.mxu0 0
      %1109 = vmatpush.bf16.msra.mxu0 0
      %1110 = vmatpush.bf16.msra.mxu0 0
      %1111 = vmatpush.bf16.msra.mxu0 0
      %1112 = vmatpush.bf16.msra.mxu0 %v1107
      %1113 = vmatpush.bf16.msra.mxu0 %v1106
      %1114 = vmatpush.bf16.msra.mxu0 %v1105
      %1115 = vmatpush.bf16.msra.mxu0 %v1104
      %1116 = vmatmul.bf16.gmra.mxu0 %v633
      %v1117 = vpop.f32.mrf.mxu0
      %v1118 = vadd.f32 %v605, %v1117
      %v1119 = vpop.f32.mrf.mxu0
      %v1120 = vadd.f32 %v610, %v1119
      %1121 = vmatmul.bf16.gmra.mxu0 %v636
      %v1122 = vpop.f32.mrf.mxu0
      %v1123 = vadd.f32 %v615, %v1122
      %v1124 = vpop.f32.mrf.mxu0
      %v1125 = vadd.f32 %v620, %v1124
      %1126 = vdwg.mxu0
      %v1127 = vmul.f32 %v1118, 0.2
      %v1128 = vmul.f32 %v1120, 0.2
      %v1129 = vmul.f32 %v1123, 0.2
      %v1130 = vmul.f32 %v1125, 0.2
      %v1131 = vmax.f32 %v1118, %v1127
      %v1132 = vmax.f32 %v1120, %v1128
      %v1133 = vmax.f32 %v1123, %v1129
      %v1134 = vmax.f32 %v1125, %v1130
      %v1135 = vmul.f32 %v1131, %v672
      %v1136 = vmul.f32 %v1132, %v677
      %v1137 = vmul.f32 %v1133, %v682
      %v1138 = vmul.f32 %v1134, %v687
      %v1139 = vadd.f32 %v1135, %v700
      %v1140 = vadd.f32 %v1136, %v705
      %v1141 = vadd.f32 %v1137, %v710
      %v1142 = vadd.f32 %v1138, %v715
      %v1143 = vmax.f32 %v1001, %v1139
      %v1144 = vmax.f32 %v1002, %v1140
      %v1145 = vmax.f32 %v1003, %v1141
      %v1146 = vmax.f32 %v1004, %v1142
      %s1147 = scalar_lea.vmem %s350, 16
      %v1148 = vld [vmem:[%s1147] sm:$0xf]
      %v1150 = vsel %vm403, %v1148, 0
      %1152 = vmatpush.bf16.msra.mxu0 0
      %1153 = vmatpush.bf16.msra.mxu0 0
      %1154 = vmatpush.bf16.msra.mxu0 0
      %1155 = vmatpush.bf16.msra.mxu0 0
      %1156 = vmatpush.bf16.msra.mxu0 0
      %1157 = vmatpush.bf16.msra.mxu0 0
      %1158 = vmatpush.bf16.msra.mxu0 0
      %1159 = vmatpush.bf16.msra.mxu0 %v1150
      %1160 = vmatmul.bf16.gmra.mxu0 %v392
      %v1161 = vpop.f32.mrf.mxu0
      %v1162 = vadd.f32 0.0, %v1161
      %v1163 = vpop.f32.mrf.mxu0
      %v1164 = vadd.f32 0.0, %v1163
      %1165 = vmatmul.bf16.gmra.mxu0 %v395
      %v1166 = vpop.f32.mrf.mxu0
      %v1167 = vadd.f32 0.0, %v1166
      %v1168 = vpop.f32.mrf.mxu0
      %v1169 = vadd.f32 0.0, %v1168
      %1170 = vmatmul.bf16.gmra.mxu0 %v398
      %v1171 = vpop.f32.mrf.mxu0
      %v1172 = vadd.f32 0.0, %v1171
      %v1173 = vpop.f32.mrf.mxu0
      %v1174 = vadd.f32 0.0, %v1173
      %1175 = vmatmul.bf16.gmra.mxu0 %v401
      %v1176 = vpop.f32.mrf.mxu0
      %v1177 = vadd.f32 0.0, %v1176
      %v1178 = vpop.f32.mrf.mxu0
      %v1179 = vadd.f32 0.0, %v1178
      %1180 = vdwg.mxu0
      %v1181 = vmul.f32 %v1162, 0.2
      %v1182 = vmul.f32 %v1164, 0.2
      %v1183 = vmul.f32 %v1167, 0.2
      %v1184 = vmul.f32 %v1169, 0.2
      %v1185 = vmul.f32 %v1172, 0.2
      %v1186 = vmul.f32 %v1174, 0.2
      %v1187 = vmul.f32 %v1177, 0.2
      %v1188 = vmul.f32 %v1179, 0.2
      %v1189 = vmax.f32 %v1162, %v1181
      %v1190 = vmax.f32 %v1164, %v1182
      %v1191 = vmax.f32 %v1167, %v1183
      %v1192 = vmax.f32 %v1169, %v1184
      %v1193 = vmax.f32 %v1172, %v1185
      %v1194 = vmax.f32 %v1174, %v1186
      %v1195 = vmax.f32 %v1177, %v1187
      %v1196 = vmax.f32 %v1179, %v1188
      %v1197 = vpack.c.bf16 %v1190, %v1189
      %v1198 = vpack.c.bf16 %v1192, %v1191
      %v1199 = vpack.c.bf16 %v1194, %v1193
      %v1200 = vpack.c.bf16 %v1196, %v1195
      %1201 = vmatpush.bf16.msra.mxu0 0
      %1202 = vmatpush.bf16.msra.mxu0 0
      %1203 = vmatpush.bf16.msra.mxu0 0
      %1204 = vmatpush.bf16.msra.mxu0 0
      %1205 = vmatpush.bf16.msra.mxu0 %v1200
      %1206 = vmatpush.bf16.msra.mxu0 %v1199
      %1207 = vmatpush.bf16.msra.mxu0 %v1198
      %1208 = vmatpush.bf16.msra.mxu0 %v1197
      %1209 = vmatmul.bf16.gmra.mxu0 %v534
      %v1210 = vpop.f32.mrf.mxu0
      %v1211 = vadd.f32 %v475, %v1210
      %v1212 = vpop.f32.mrf.mxu0
      %v1213 = vadd.f32 %v480, %v1212
      %1214 = vmatmul.bf16.gmra.mxu0 %v537
      %v1215 = vpop.f32.mrf.mxu0
      %v1216 = vadd.f32 %v485, %v1215
      %v1217 = vpop.f32.mrf.mxu0
      %v1218 = vadd.f32 %v490, %v1217
      %1219 = vmatmul.bf16.gmra.mxu0 %v540
      %v1220 = vpop.f32.mrf.mxu0
      %v1221 = vadd.f32 %v495, %v1220
      %v1222 = vpop.f32.mrf.mxu0
      %v1223 = vadd.f32 %v500, %v1222
      %1224 = vmatmul.bf16.gmra.mxu0 %v543
      %v1225 = vpop.f32.mrf.mxu0
      %v1226 = vadd.f32 %v505, %v1225
      %v1227 = vpop.f32.mrf.mxu0
      %v1228 = vadd.f32 %v510, %v1227
      %1229 = vdwg.mxu0
      %v1230 = vmul.f32 %v1211, 0.2
      %v1231 = vmul.f32 %v1213, 0.2
      %v1232 = vmul.f32 %v1216, 0.2
      %v1233 = vmul.f32 %v1218, 0.2
      %v1234 = vmul.f32 %v1221, 0.2
      %v1235 = vmul.f32 %v1223, 0.2
      %v1236 = vmul.f32 %v1226, 0.2
      %v1237 = vmul.f32 %v1228, 0.2
      %v1238 = vmax.f32 %v1211, %v1230
      %v1239 = vmax.f32 %v1213, %v1231
      %v1240 = vmax.f32 %v1216, %v1232
      %v1241 = vmax.f32 %v1218, %v1233
      %v1242 = vmax.f32 %v1221, %v1234
      %v1243 = vmax.f32 %v1223, %v1235
      %v1244 = vmax.f32 %v1226, %v1236
      %v1245 = vmax.f32 %v1228, %v1237
      %v1246 = vpack.c.bf16 %v1239, %v1238
      %v1247 = vpack.c.bf16 %v1241, %v1240
      %v1248 = vpack.c.bf16 %v1243, %v1242
      %v1249 = vpack.c.bf16 %v1245, %v1244
      %1250 = vmatpush.bf16.msra.mxu0 0
      %1251 = vmatpush.bf16.msra.mxu0 0
      %1252 = vmatpush.bf16.msra.mxu0 0
      %1253 = vmatpush.bf16.msra.mxu0 0
      %1254 = vmatpush.bf16.msra.mxu0 %v1249
      %1255 = vmatpush.bf16.msra.mxu0 %v1248
      %1256 = vmatpush.bf16.msra.mxu0 %v1247
      %1257 = vmatpush.bf16.msra.mxu0 %v1246
      %1258 = vmatmul.bf16.gmra.mxu0 %v633
      %v1259 = vpop.f32.mrf.mxu0
      %v1260 = vadd.f32 %v605, %v1259
      %v1261 = vpop.f32.mrf.mxu0
      %v1262 = vadd.f32 %v610, %v1261
      %1263 = vmatmul.bf16.gmra.mxu0 %v636
      %v1264 = vpop.f32.mrf.mxu0
      %v1265 = vadd.f32 %v615, %v1264
      %v1266 = vpop.f32.mrf.mxu0
      %v1267 = vadd.f32 %v620, %v1266
      %1268 = vdwg.mxu0
      %v1269 = vmul.f32 %v1260, 0.2
      %v1270 = vmul.f32 %v1262, 0.2
      %v1271 = vmul.f32 %v1265, 0.2
      %v1272 = vmul.f32 %v1267, 0.2
      %v1273 = vmax.f32 %v1260, %v1269
      %v1274 = vmax.f32 %v1262, %v1270
      %v1275 = vmax.f32 %v1265, %v1271
      %v1276 = vmax.f32 %v1267, %v1272
      %v1277 = vmul.f32 %v1273, %v672
      %v1278 = vmul.f32 %v1274, %v677
      %v1279 = vmul.f32 %v1275, %v682
      %v1280 = vmul.f32 %v1276, %v687
      %v1281 = vadd.f32 %v1277, %v700
      %v1282 = vadd.f32 %v1278, %v705
      %v1283 = vadd.f32 %v1279, %v710
      %v1284 = vadd.f32 %v1280, %v715
      %v1285 = vmax.f32 %v1143, %v1281
      %v1286 = vmax.f32 %v1144, %v1282
      %v1287 = vmax.f32 %v1145, %v1283
      %v1288 = vmax.f32 %v1146, %v1284
      %s1289 = scalar_lea.vmem %s350, 20
      %v1290 = vld [vmem:[%s1289] sm:$0xf]
      %v1292 = vsel %vm403, %v1290, 0
      %1294 = vmatpush.bf16.msra.mxu0 0
      %1295 = vmatpush.bf16.msra.mxu0 0
      %1296 = vmatpush.bf16.msra.mxu0 0
      %1297 = vmatpush.bf16.msra.mxu0 0
      %1298 = vmatpush.bf16.msra.mxu0 0
      %1299 = vmatpush.bf16.msra.mxu0 0
      %1300 = vmatpush.bf16.msra.mxu0 0
      %1301 = vmatpush.bf16.msra.mxu0 %v1292
      %1302 = vmatmul.bf16.gmra.mxu0 %v392
      %v1303 = vpop.f32.mrf.mxu0
      %v1304 = vadd.f32 0.0, %v1303
      %v1305 = vpop.f32.mrf.mxu0
      %v1306 = vadd.f32 0.0, %v1305
      %1307 = vmatmul.bf16.gmra.mxu0 %v395
      %v1308 = vpop.f32.mrf.mxu0
      %v1309 = vadd.f32 0.0, %v1308
      %v1310 = vpop.f32.mrf.mxu0
      %v1311 = vadd.f32 0.0, %v1310
      %1312 = vmatmul.bf16.gmra.mxu0 %v398
      %v1313 = vpop.f32.mrf.mxu0
      %v1314 = vadd.f32 0.0, %v1313
      %v1315 = vpop.f32.mrf.mxu0
      %v1316 = vadd.f32 0.0, %v1315
      %1317 = vmatmul.bf16.gmra.mxu0 %v401
      %v1318 = vpop.f32.mrf.mxu0
      %v1319 = vadd.f32 0.0, %v1318
      %v1320 = vpop.f32.mrf.mxu0
      %v1321 = vadd.f32 0.0, %v1320
      %1322 = vdwg.mxu0
      %v1323 = vmul.f32 %v1304, 0.2
      %v1324 = vmul.f32 %v1306, 0.2
      %v1325 = vmul.f32 %v1309, 0.2
      %v1326 = vmul.f32 %v1311, 0.2
      %v1327 = vmul.f32 %v1314, 0.2
      %v1328 = vmul.f32 %v1316, 0.2
      %v1329 = vmul.f32 %v1319, 0.2
      %v1330 = vmul.f32 %v1321, 0.2
      %v1331 = vmax.f32 %v1304, %v1323
      %v1332 = vmax.f32 %v1306, %v1324
      %v1333 = vmax.f32 %v1309, %v1325
      %v1334 = vmax.f32 %v1311, %v1326
      %v1335 = vmax.f32 %v1314, %v1327
      %v1336 = vmax.f32 %v1316, %v1328
      %v1337 = vmax.f32 %v1319, %v1329
      %v1338 = vmax.f32 %v1321, %v1330
      %v1339 = vpack.c.bf16 %v1332, %v1331
      %v1340 = vpack.c.bf16 %v1334, %v1333
      %v1341 = vpack.c.bf16 %v1336, %v1335
      %v1342 = vpack.c.bf16 %v1338, %v1337
      %1343 = vmatpush.bf16.msra.mxu0 0
      %1344 = vmatpush.bf16.msra.mxu0 0
      %1345 = vmatpush.bf16.msra.mxu0 0
      %1346 = vmatpush.bf16.msra.mxu0 0
      %1347 = vmatpush.bf16.msra.mxu0 %v1342
      %1348 = vmatpush.bf16.msra.mxu0 %v1341
      %1349 = vmatpush.bf16.msra.mxu0 %v1340
      %1350 = vmatpush.bf16.msra.mxu0 %v1339
      %1351 = vmatmul.bf16.gmra.mxu0 %v534
      %v1352 = vpop.f32.mrf.mxu0
      %v1353 = vadd.f32 %v475, %v1352
      %v1354 = vpop.f32.mrf.mxu0
      %v1355 = vadd.f32 %v480, %v1354
      %1356 = vmatmul.bf16.gmra.mxu0 %v537
      %v1357 = vpop.f32.mrf.mxu0
      %v1358 = vadd.f32 %v485, %v1357
      %v1359 = vpop.f32.mrf.mxu0
      %v1360 = vadd.f32 %v490, %v1359
      %1361 = vmatmul.bf16.gmra.mxu0 %v540
      %v1362 = vpop.f32.mrf.mxu0
      %v1363 = vadd.f32 %v495, %v1362
      %v1364 = vpop.f32.mrf.mxu0
      %v1365 = vadd.f32 %v500, %v1364
      %1366 = vmatmul.bf16.gmra.mxu0 %v543
      %v1367 = vpop.f32.mrf.mxu0
      %v1368 = vadd.f32 %v505, %v1367
      %v1369 = vpop.f32.mrf.mxu0
      %v1370 = vadd.f32 %v510, %v1369
      %1371 = vdwg.mxu0
      %v1372 = vmul.f32 %v1353, 0.2
      %v1373 = vmul.f32 %v1355, 0.2
      %v1374 = vmul.f32 %v1358, 0.2
      %v1375 = vmul.f32 %v1360, 0.2
      %v1376 = vmul.f32 %v1363, 0.2
      %v1377 = vmul.f32 %v1365, 0.2
      %v1378 = vmul.f32 %v1368, 0.2
      %v1379 = vmul.f32 %v1370, 0.2
      %v1380 = vmax.f32 %v1353, %v1372
      %v1381 = vmax.f32 %v1355, %v1373
      %v1382 = vmax.f32 %v1358, %v1374
      %v1383 = vmax.f32 %v1360, %v1375
      %v1384 = vmax.f32 %v1363, %v1376
      %v1385 = vmax.f32 %v1365, %v1377
      %v1386 = vmax.f32 %v1368, %v1378
      %v1387 = vmax.f32 %v1370, %v1379
      %v1388 = vpack.c.bf16 %v1381, %v1380
      %v1389 = vpack.c.bf16 %v1383, %v1382
      %v1390 = vpack.c.bf16 %v1385, %v1384
      %v1391 = vpack.c.bf16 %v1387, %v1386
      %1392 = vmatpush.bf16.msra.mxu0 0
      %1393 = vmatpush.bf16.msra.mxu0 0
      %1394 = vmatpush.bf16.msra.mxu0 0
      %1395 = vmatpush.bf16.msra.mxu0 0
      %1396 = vmatpush.bf16.msra.mxu0 %v1391
      %1397 = vmatpush.bf16.msra.mxu0 %v1390
      %1398 = vmatpush.bf16.msra.mxu0 %v1389
      %1399 = vmatpush.bf16.msra.mxu0 %v1388
      %1400 = vmatmul.bf16.gmra.mxu0 %v633
      %v1401 = vpop.f32.mrf.mxu0
      %v1402 = vadd.f32 %v605, %v1401
      %v1403 = vpop.f32.mrf.mxu0
      %v1404 = vadd.f32 %v610, %v1403
      %1405 = vmatmul.bf16.gmra.mxu0 %v636
      %v1406 = vpop.f32.mrf.mxu0
      %v1407 = vadd.f32 %v615, %v1406
      %v1408 = vpop.f32.mrf.mxu0
      %v1409 = vadd.f32 %v620, %v1408
      %1410 = vdwg.mxu0
      %v1411 = vmul.f32 %v1402, 0.2
      %v1412 = vmul.f32 %v1404, 0.2
      %v1413 = vmul.f32 %v1407, 0.2
      %v1414 = vmul.f32 %v1409, 0.2
      %v1415 = vmax.f32 %v1402, %v1411
      %v1416 = vmax.f32 %v1404, %v1412
      %v1417 = vmax.f32 %v1407, %v1413
      %v1418 = vmax.f32 %v1409, %v1414
      %v1419 = vmul.f32 %v1415, %v672
      %v1420 = vmul.f32 %v1416, %v677
      %v1421 = vmul.f32 %v1417, %v682
      %v1422 = vmul.f32 %v1418, %v687
      %v1423 = vadd.f32 %v1419, %v700
      %v1424 = vadd.f32 %v1420, %v705
      %v1425 = vadd.f32 %v1421, %v710
      %v1426 = vadd.f32 %v1422, %v715
      %v1427 = vmax.f32 %v1285, %v1423
      %v1428 = vmax.f32 %v1286, %v1424
      %v1429 = vmax.f32 %v1287, %v1425
      %v1430 = vmax.f32 %v1288, %v1426
      %s1431 = scalar_lea.vmem %s350, 24
      %v1432 = vld [vmem:[%s1431] sm:$0xf]
      %v1434 = vsel %vm403, %v1432, 0
      %1436 = vmatpush.bf16.msra.mxu0 0
      %1437 = vmatpush.bf16.msra.mxu0 0
      %1438 = vmatpush.bf16.msra.mxu0 0
      %1439 = vmatpush.bf16.msra.mxu0 0
      %1440 = vmatpush.bf16.msra.mxu0 0
      %1441 = vmatpush.bf16.msra.mxu0 0
      %1442 = vmatpush.bf16.msra.mxu0 0
      %1443 = vmatpush.bf16.msra.mxu0 %v1434
      %1444 = vmatmul.bf16.gmra.mxu0 %v392
      %v1445 = vpop.f32.mrf.mxu0
      %v1446 = vadd.f32 0.0, %v1445
      %v1447 = vpop.f32.mrf.mxu0
      %v1448 = vadd.f32 0.0, %v1447
      %1449 = vmatmul.bf16.gmra.mxu0 %v395
      %v1450 = vpop.f32.mrf.mxu0
      %v1451 = vadd.f32 0.0, %v1450
      %v1452 = vpop.f32.mrf.mxu0
      %v1453 = vadd.f32 0.0, %v1452
      %1454 = vmatmul.bf16.gmra.mxu0 %v398
      %v1455 = vpop.f32.mrf.mxu0
      %v1456 = vadd.f32 0.0, %v1455
      %v1457 = vpop.f32.mrf.mxu0
      %v1458 = vadd.f32 0.0, %v1457
      %1459 = vmatmul.bf16.gmra.mxu0 %v401
      %v1460 = vpop.f32.mrf.mxu0
      %v1461 = vadd.f32 0.0, %v1460
      %v1462 = vpop.f32.mrf.mxu0
      %v1463 = vadd.f32 0.0, %v1462
      %1464 = vdwg.mxu0
      %v1465 = vmul.f32 %v1446, 0.2
      %v1466 = vmul.f32 %v1448, 0.2
      %v1467 = vmul.f32 %v1451, 0.2
      %v1468 = vmul.f32 %v1453, 0.2
      %v1469 = vmul.f32 %v1456, 0.2
      %v1470 = vmul.f32 %v1458, 0.2
      %v1471 = vmul.f32 %v1461, 0.2
      %v1472 = vmul.f32 %v1463, 0.2
      %v1473 = vmax.f32 %v1446, %v1465
      %v1474 = vmax.f32 %v1448, %v1466
      %v1475 = vmax.f32 %v1451, %v1467
      %v1476 = vmax.f32 %v1453, %v1468
      %v1477 = vmax.f32 %v1456, %v1469
      %v1478 = vmax.f32 %v1458, %v1470
      %v1479 = vmax.f32 %v1461, %v1471
      %v1480 = vmax.f32 %v1463, %v1472
      %v1481 = vpack.c.bf16 %v1474, %v1473
      %v1482 = vpack.c.bf16 %v1476, %v1475
      %v1483 = vpack.c.bf16 %v1478, %v1477
      %v1484 = vpack.c.bf16 %v1480, %v1479
      %1485 = vmatpush.bf16.msra.mxu0 0
      %1486 = vmatpush.bf16.msra.mxu0 0
      %1487 = vmatpush.bf16.msra.mxu0 0
      %1488 = vmatpush.bf16.msra.mxu0 0
      %1489 = vmatpush.bf16.msra.mxu0 %v1484
      %1490 = vmatpush.bf16.msra.mxu0 %v1483
      %1491 = vmatpush.bf16.msra.mxu0 %v1482
      %1492 = vmatpush.bf16.msra.mxu0 %v1481
      %1493 = vmatmul.bf16.gmra.mxu0 %v534
      %v1494 = vpop.f32.mrf.mxu0
      %v1495 = vadd.f32 %v475, %v1494
      %v1496 = vpop.f32.mrf.mxu0
      %v1497 = vadd.f32 %v480, %v1496
      %1498 = vmatmul.bf16.gmra.mxu0 %v537
      %v1499 = vpop.f32.mrf.mxu0
      %v1500 = vadd.f32 %v485, %v1499
      %v1501 = vpop.f32.mrf.mxu0
      %v1502 = vadd.f32 %v490, %v1501
      %1503 = vmatmul.bf16.gmra.mxu0 %v540
      %v1504 = vpop.f32.mrf.mxu0
      %v1505 = vadd.f32 %v495, %v1504
      %v1506 = vpop.f32.mrf.mxu0
      %v1507 = vadd.f32 %v500, %v1506
      %1508 = vmatmul.bf16.gmra.mxu0 %v543
      %v1509 = vpop.f32.mrf.mxu0
      %v1510 = vadd.f32 %v505, %v1509
      %v1511 = vpop.f32.mrf.mxu0
      %v1512 = vadd.f32 %v510, %v1511
      %1513 = vdwg.mxu0
      %v1514 = vmul.f32 %v1495, 0.2
      %v1515 = vmul.f32 %v1497, 0.2
      %v1516 = vmul.f32 %v1500, 0.2
      %v1517 = vmul.f32 %v1502, 0.2
      %v1518 = vmul.f32 %v1505, 0.2
      %v1519 = vmul.f32 %v1507, 0.2
      %v1520 = vmul.f32 %v1510, 0.2
      %v1521 = vmul.f32 %v1512, 0.2
      %v1522 = vmax.f32 %v1495, %v1514
      %v1523 = vmax.f32 %v1497, %v1515
      %v1524 = vmax.f32 %v1500, %v1516
      %v1525 = vmax.f32 %v1502, %v1517
      %v1526 = vmax.f32 %v1505, %v1518
      %v1527 = vmax.f32 %v1507, %v1519
      %v1528 = vmax.f32 %v1510, %v1520
      %v1529 = vmax.f32 %v1512, %v1521
      %v1530 = vpack.c.bf16 %v1523, %v1522
      %v1531 = vpack.c.bf16 %v1525, %v1524
      %v1532 = vpack.c.bf16 %v1527, %v1526
      %v1533 = vpack.c.bf16 %v1529, %v1528
      %1534 = vmatpush.bf16.msra.mxu0 0
      %1535 = vmatpush.bf16.msra.mxu0 0
      %1536 = vmatpush.bf16.msra.mxu0 0
      %1537 = vmatpush.bf16.msra.mxu0 0
      %1538 = vmatpush.bf16.msra.mxu0 %v1533
      %1539 = vmatpush.bf16.msra.mxu0 %v1532
      %1540 = vmatpush.bf16.msra.mxu0 %v1531
      %1541 = vmatpush.bf16.msra.mxu0 %v1530
      %1542 = vmatmul.bf16.gmra.mxu0 %v633
      %v1543 = vpop.f32.mrf.mxu0
      %v1544 = vadd.f32 %v605, %v1543
      %v1545 = vpop.f32.mrf.mxu0
      %v1546 = vadd.f32 %v610, %v1545
      %1547 = vmatmul.bf16.gmra.mxu0 %v636
      %v1548 = vpop.f32.mrf.mxu0
      %v1549 = vadd.f32 %v615, %v1548
      %v1550 = vpop.f32.mrf.mxu0
      %v1551 = vadd.f32 %v620, %v1550
      %1552 = vdwg.mxu0
      %v1553 = vmul.f32 %v1544, 0.2
      %v1554 = vmul.f32 %v1546, 0.2
      %v1555 = vmul.f32 %v1549, 0.2
      %v1556 = vmul.f32 %v1551, 0.2
      %v1557 = vmax.f32 %v1544, %v1553
      %v1558 = vmax.f32 %v1546, %v1554
      %v1559 = vmax.f32 %v1549, %v1555
      %v1560 = vmax.f32 %v1551, %v1556
      %v1561 = vmul.f32 %v1557, %v672
      %v1562 = vmul.f32 %v1558, %v677
      %v1563 = vmul.f32 %v1559, %v682
      %v1564 = vmul.f32 %v1560, %v687
      %v1565 = vadd.f32 %v1561, %v700
      %v1566 = vadd.f32 %v1562, %v705
      %v1567 = vadd.f32 %v1563, %v710
      %v1568 = vadd.f32 %v1564, %v715
      %v1569 = vmax.f32 %v1427, %v1565
      %v1570 = vmax.f32 %v1428, %v1566
      %v1571 = vmax.f32 %v1429, %v1567
      %v1572 = vmax.f32 %v1430, %v1568
      %s1573 = scalar_lea.vmem %s350, 28
      %v1574 = vld [vmem:[%s1573] sm:$0xf]
      %v1576 = vsel %vm403, %v1574, 0
      %1578 = vmatpush.bf16.msra.mxu0 0
      %1579 = vmatpush.bf16.msra.mxu0 0
      %1580 = vmatpush.bf16.msra.mxu0 0
      %1581 = vmatpush.bf16.msra.mxu0 0
      %1582 = vmatpush.bf16.msra.mxu0 0
      %1583 = vmatpush.bf16.msra.mxu0 0
      %1584 = vmatpush.bf16.msra.mxu0 0
      %1585 = vmatpush.bf16.msra.mxu0 %v1576
      %1586 = vmatmul.bf16.gmra.mxu0 %v392
      %v1587 = vpop.f32.mrf.mxu0
      %v1588 = vadd.f32 0.0, %v1587
      %v1589 = vpop.f32.mrf.mxu0
      %v1590 = vadd.f32 0.0, %v1589
      %1591 = vmatmul.bf16.gmra.mxu0 %v395
      %v1592 = vpop.f32.mrf.mxu0
      %v1593 = vadd.f32 0.0, %v1592
      %v1594 = vpop.f32.mrf.mxu0
      %v1595 = vadd.f32 0.0, %v1594
      %1596 = vmatmul.bf16.gmra.mxu0 %v398
      %v1597 = vpop.f32.mrf.mxu0
      %v1598 = vadd.f32 0.0, %v1597
      %v1599 = vpop.f32.mrf.mxu0
      %v1600 = vadd.f32 0.0, %v1599
      %1601 = vmatmul.bf16.gmra.mxu0 %v401
      %v1602 = vpop.f32.mrf.mxu0
      %v1603 = vadd.f32 0.0, %v1602
      %v1604 = vpop.f32.mrf.mxu0
      %v1605 = vadd.f32 0.0, %v1604
      %1606 = vdwg.mxu0
      %v1607 = vmul.f32 %v1588, 0.2
      %v1608 = vmul.f32 %v1590, 0.2
      %v1609 = vmul.f32 %v1593, 0.2
      %v1610 = vmul.f32 %v1595, 0.2
      %v1611 = vmul.f32 %v1598, 0.2
      %v1612 = vmul.f32 %v1600, 0.2
      %v1613 = vmul.f32 %v1603, 0.2
      %v1614 = vmul.f32 %v1605, 0.2
      %v1615 = vmax.f32 %v1588, %v1607
      %v1616 = vmax.f32 %v1590, %v1608
      %v1617 = vmax.f32 %v1593, %v1609
      %v1618 = vmax.f32 %v1595, %v1610
      %v1619 = vmax.f32 %v1598, %v1611
      %v1620 = vmax.f32 %v1600, %v1612
      %v1621 = vmax.f32 %v1603, %v1613
      %v1622 = vmax.f32 %v1605, %v1614
      %v1623 = vpack.c.bf16 %v1616, %v1615
      %v1624 = vpack.c.bf16 %v1618, %v1617
      %v1625 = vpack.c.bf16 %v1620, %v1619
      %v1626 = vpack.c.bf16 %v1622, %v1621
      %1627 = vmatpush.bf16.msra.mxu0 0
      %1628 = vmatpush.bf16.msra.mxu0 0
      %1629 = vmatpush.bf16.msra.mxu0 0
      %1630 = vmatpush.bf16.msra.mxu0 0
      %1631 = vmatpush.bf16.msra.mxu0 %v1626
      %1632 = vmatpush.bf16.msra.mxu0 %v1625
      %1633 = vmatpush.bf16.msra.mxu0 %v1624
      %1634 = vmatpush.bf16.msra.mxu0 %v1623
      %1635 = vmatmul.bf16.gmra.mxu0 %v534
      %v1636 = vpop.f32.mrf.mxu0
      %v1637 = vadd.f32 %v475, %v1636
      %v1638 = vpop.f32.mrf.mxu0
      %v1639 = vadd.f32 %v480, %v1638
      %1640 = vmatmul.bf16.gmra.mxu0 %v537
      %v1641 = vpop.f32.mrf.mxu0
      %v1642 = vadd.f32 %v485, %v1641
      %v1643 = vpop.f32.mrf.mxu0
      %v1644 = vadd.f32 %v490, %v1643
      %1645 = vmatmul.bf16.gmra.mxu0 %v540
      %v1646 = vpop.f32.mrf.mxu0
      %v1647 = vadd.f32 %v495, %v1646
      %v1648 = vpop.f32.mrf.mxu0
      %v1649 = vadd.f32 %v500, %v1648
      %1650 = vmatmul.bf16.gmra.mxu0 %v543
      %v1651 = vpop.f32.mrf.mxu0
      %v1652 = vadd.f32 %v505, %v1651
      %v1653 = vpop.f32.mrf.mxu0
      %v1654 = vadd.f32 %v510, %v1653
      %1655 = vdwg.mxu0
      %v1656 = vmul.f32 %v1637, 0.2
      %v1657 = vmul.f32 %v1639, 0.2
      %v1658 = vmul.f32 %v1642, 0.2
      %v1659 = vmul.f32 %v1644, 0.2
      %v1660 = vmul.f32 %v1647, 0.2
      %v1661 = vmul.f32 %v1649, 0.2
      %v1662 = vmul.f32 %v1652, 0.2
      %v1663 = vmul.f32 %v1654, 0.2
      %v1664 = vmax.f32 %v1637, %v1656
      %v1665 = vmax.f32 %v1639, %v1657
      %v1666 = vmax.f32 %v1642, %v1658
      %v1667 = vmax.f32 %v1644, %v1659
      %v1668 = vmax.f32 %v1647, %v1660
      %v1669 = vmax.f32 %v1649, %v1661
      %v1670 = vmax.f32 %v1652, %v1662
      %v1671 = vmax.f32 %v1654, %v1663
      %v1672 = vpack.c.bf16 %v1665, %v1664
      %v1673 = vpack.c.bf16 %v1667, %v1666
      %v1674 = vpack.c.bf16 %v1669, %v1668
      %v1675 = vpack.c.bf16 %v1671, %v1670
      %1676 = vmatpush.bf16.msra.mxu0 0
      %1677 = vmatpush.bf16.msra.mxu0 0
      %1678 = vmatpush.bf16.msra.mxu0 0
      %1679 = vmatpush.bf16.msra.mxu0 0
      %1680 = vmatpush.bf16.msra.mxu0 %v1675
      %1681 = vmatpush.bf16.msra.mxu0 %v1674
      %1682 = vmatpush.bf16.msra.mxu0 %v1673
      %1683 = vmatpush.bf16.msra.mxu0 %v1672
      %1684 = vmatmul.bf16.gmra.mxu0 %v633
      %v1685 = vpop.f32.mrf.mxu0
      %v1686 = vadd.f32 %v605, %v1685
      %v1687 = vpop.f32.mrf.mxu0
      %v1688 = vadd.f32 %v610, %v1687
      %1689 = vmatmul.bf16.gmra.mxu0 %v636
      %v1690 = vpop.f32.mrf.mxu0
      %v1691 = vadd.f32 %v615, %v1690
      %v1692 = vpop.f32.mrf.mxu0
      %v1693 = vadd.f32 %v620, %v1692
      %1694 = vdwg.mxu0
      %v1695 = vmul.f32 %v1686, 0.2
      %v1696 = vmul.f32 %v1688, 0.2
      %v1697 = vmul.f32 %v1691, 0.2
      %v1698 = vmul.f32 %v1693, 0.2
      %v1699 = vmax.f32 %v1686, %v1695
      %v1700 = vmax.f32 %v1688, %v1696
      %v1701 = vmax.f32 %v1691, %v1697
      %v1702 = vmax.f32 %v1693, %v1698
      %v1703 = vmul.f32 %v1699, %v672
      %v1704 = vmul.f32 %v1700, %v677
      %v1705 = vmul.f32 %v1701, %v682
      %v1706 = vmul.f32 %v1702, %v687
      %v1707 = vadd.f32 %v1703, %v700
      %v1708 = vadd.f32 %v1704, %v705
      %v1709 = vadd.f32 %v1705, %v710
      %v1710 = vadd.f32 %v1706, %v715
      %v1711 = vmax.f32 %v1569, %v1707
      %v1712 = vmax.f32 %v1570, %v1708
      %v1713 = vmax.f32 %v1571, %v1709
      %v1714 = vmax.f32 %v1572, %v1710
      %p1715 = scmp.eq.s32.totalorder %s26, 0
      // Predicated region
      $region53: #{tpu_custom_call.1} parent=51 // pred_check
        %p1716 = pneg %p1715
      $region54: #{tpu_custom_call.1} parent=51 // pred_check_branch
        %1718 = sbr.rel (%p1716) target = $region56
      $region55: #{tpu_custom_call.1} parent=51 // pred_region
        %vm1719 = vcmask 130048
        %1720 = vst.msk [vmem:[%s359] sm:$0xff] %vm1719, %v1711
        %1721 = vst.msk [vmem:[%s359 + $0x8] sm:$0xff] %vm1719, %v1712
        %1722 = vst.msk [vmem:[%s359 + $0x10] sm:$0xff] %vm1719, %v1713
        %1723 = vst.msk [vmem:[%s359 + $0x18] sm:$0xff] %vm1719, %v1714
      $region56: #{tpu_custom_call.1} parent=51 // pred_fallthru
        _
      %p1724 = scmp.gt.s32.totalorder %s26, 0
      // Predicated region
      $region57: #{tpu_custom_call.1} parent=51 // pred_check
        %p1725 = pneg %p1724
      $region58: #{tpu_custom_call.1} parent=51 // pred_check_branch
        %1727 = sbr.rel (%p1725) target = $region60
      $region59: #{tpu_custom_call.1} parent=51 // pred_region
        %v1728 = vld [vmem:[%s359] sm:$0xff]
        %v1729 = vld [vmem:[%s359 + $0x8] sm:$0xff]
        %v1730 = vld [vmem:[%s359 + $0x10] sm:$0xff]
        %v1731 = vld [vmem:[%s359 + $0x18] sm:$0xff]
        %v1732 = vmax.f32 %v1728, %v1711
        %v1733 = vmax.f32 %v1729, %v1712
        %v1734 = vmax.f32 %v1730, %v1713
        %v1735 = vmax.f32 %v1731, %v1714
        %vm1736 = vcmask 130048
        %1737 = vst.msk [vmem:[%s359] sm:$0xff] %vm1736, %v1732
        %1738 = vst.msk [vmem:[%s359 + $0x8] sm:$0xff] %vm1736, %v1733
        %1739 = vst.msk [vmem:[%s359 + $0x10] sm:$0xff] %vm1736, %v1734
        %1740 = vst.msk [vmem:[%s359 + $0x18] sm:$0xff] %vm1736, %v1735
      $region60: #{tpu_custom_call.1} parent=51 // pred_fallthru
        _
      %p1741 = scmp.lt.s32.totalorder %s24, 1
      %s1742 = scalar_select %p1741, %s24, 1
      %p1743 = scmp.lt.s32.totalorder %s25, 0
      %s1744 = scalar_select %p1743, %s25, 0
      %s1745 = smul.addr %s1742, 4
      %s1746 = sadd.s32 %s1744, %s1745
      %s1747 = smul.addr %s1746, 8
      %s1748 = scalar_lea.vmem %s8, %s1747
      // Predicated region
      $region61: #{tpu_custom_call.1} parent=51 // pred_check
        %p1749 = pneg %p235
      $region62: #{tpu_custom_call.1} parent=51 // pred_check_branch
        %1751 = sbr.rel (%p1749) target = $region64
      $region63: #{tpu_custom_call.1} parent=51 // pred_region
        _
      $region64: #{tpu_custom_call.1} parent=51 // pred_fallthru
        _
    $region52: #{tpu_custom_call.1} parent=5 // pred_fallthru
      _
    %p1752 = scmp.le.s32.totalorder 2, %s14
    // Predicated region
    $region65: #{tpu_custom_call.1} parent=5 // pred_check
      %p1753 = pneg %p1752
    $region66: #{tpu_custom_call.1} parent=5 // pred_check_branch
      %1755 = sbr.rel (%p1753) target = $region68
    $region67: #{tpu_custom_call.1} parent=5 // pred_region
      %s1756 = ssub.s32 %s14, 2
      // Predicated region
      $region69: #{tpu_custom_call.1} parent=67 // pred_check
        %p1757 = pneg %p241
      $region70: #{tpu_custom_call.1} parent=67 // pred_check_branch
        %1759 = sbr.rel (%p1757) target = $region72
      $region71: #{tpu_custom_call.1} parent=67 // pred_region
        %p1760 = scmp.lt.s32.totalorder %s27, 1
        %s1761 = scalar_select %p1760, %s27, 1
        %p1762 = scmp.lt.s32.totalorder %s28, 0
        %s1763 = scalar_select %p1762, %s28, 0
        %s1764 = smul.addr %s1761, 4
        %s1765 = sadd.s32 %s1763, %s1764
        %s1766 = smul.addr %s1765, 8
        %s1767 = scalar_lea.vmem %s8, %s1766
      $region72: #{tpu_custom_call.1} parent=67 // pred_fallthru
        _
    $region68: #{tpu_custom_call.1} parent=5 // pred_fallthru
      _
  $region6: #{tpu_custom_call.1} parent=0 // loop_footer
    %s18 = sadd.s32 1, %s14
  $region7: #{tpu_custom_call.1} parent=0 // loop_footer_branch
    %13 = sbr.rel target = $region3
  $region8: #{tpu_custom_call.1} parent=0 // loop_exit
    _

</llo_original>
